<compile_context>
chip_gen: v6e
topology: v6e:2x2x1
jax: 0.10.0
libtpu: 0.0.40
codegen_flags: <defaults>
</compile_context>

<pallas_src>
import jax
import jax.numpy as jnp
from jax.experimental import pallas as pl
from jax.experimental.pallas import tpu as pltpu


# ----------------------------------------------------------------------------
# Fused Pallas kernel (encoder + decoder), transposed (channel, point) layout
# ----------------------------------------------------------------------------
def fused_onet_kernel(pT_ref, xT_ref, w3_ref, w32_ref, woutT_ref, bias_ref,
                      bout_ref, o_ref, cond_ref):
    """One batch element / one T-tile per grid step.

    pT_ref   : (1, 3, TT)   query points (transposed, lane axis = queries)
    xT_ref   : (1, 3, N)    input point cloud (transposed)
    w3_ref   : (2, H, 3)    [enc_w1^T, dec_wp^T]
    w32_ref  : (7, H, H)    [enc_w2^T, wc0^T, w00^T, w01^T, wc1^T, w10^T, w11^T]
    woutT_ref: (1, H)       fc_out weight, transposed
    bias_ref : (H, 9)       cols: enc_b1, enc_b2, dec_bp, bc0, b00, b01, bc1, b10, b11
    bout_ref : (1, 1)       fc_out bias
    o_ref    : (1, 1, TT)   occupancy logits (lane-dense)
    cond_ref : (2, H, 1)    VMEM scratch: fc_c(c)+bc rows, cached across T-tiles
    """
    tj = pl.program_id(1)

    # --- Encoder + conditioning precompute: once per batch element ----------
    @pl.when(tj == 0)
    def _encode():
        x = xT_ref[0]                                                 # (3, N)
        h = jnp.dot(w3_ref[0], x,
                    preferred_element_type=jnp.float32) + bias_ref[:, 0:1]
        h = jax.nn.relu(h)                                            # (H, N)
        h = jnp.dot(w32_ref[0], h,
                    preferred_element_type=jnp.float32) + bias_ref[:, 1:2]
        c = jnp.max(h, axis=1, keepdims=True)                         # (C, 1) max-pool over points
        # Per-block conditioning rows: fc_c(c) + bc, hoisted out of the T loop.
        cond_ref[0] = (jnp.dot(w32_ref[1], c,
                               preferred_element_type=jnp.float32) + bias_ref[:, 3:4])
        cond_ref[1] = (jnp.dot(w32_ref[4], c,
                               preferred_element_type=jnp.float32) + bias_ref[:, 6:7])

    # --- Decoder on this T-tile ---------------------------------------------
    p = pT_ref[0]                                                     # (3, TT)
    net = jnp.dot(w3_ref[1], p,
                  preferred_element_type=jnp.float32) + bias_ref[:, 2:3]   # (H, TT)

    def res_block(net, cond, w0, b0, w1, b1):
        # conditioning broadcast over queries, then ResnetBlockFC
        net = net + cond
        h = jnp.dot(w0, jax.nn.relu(net), preferred_element_type=jnp.float32) + b0
        dx = jnp.dot(w1, jax.nn.relu(h), preferred_element_type=jnp.float32) + b1
        return net + dx

    net = res_block(net, cond_ref[0],
                    w32_ref[2], bias_ref[:, 4:5], w32_ref[3], bias_ref[:, 5:6])
    net = res_block(net, cond_ref[1],
                    w32_ref[5], bias_ref[:, 7:8], w32_ref[6], bias_ref[:, 8:9])

    # fc_out in transposed form: (1, H) @ (H, TT) -> lane-dense (1, TT)
    logits = (jnp.dot(woutT_ref[...], jax.nn.relu(net),
                      preferred_element_type=jnp.float32) + bout_ref[...])
    o_ref[0] = logits                                                 # (1, TT)


# ----------------------------------------------------------------------------
# Wrapper
# ----------------------------------------------------------------------------
def forward(p, inputs, packed, *, t_tile=None, sample=True):
    """Full DynamicPlanesConvolutionalOccupancyNetwork.forward.

    p      : (B, T, 3) query points
    inputs : (B, N, 3) conditioning point cloud
    Returns (logits, probs) of the Bernoulli occupancy distribution, shape (B, T).

    p0_z is Normal(tensor([]), tensor([])) -> z has shape (B, 0): it carries no
    information and the decoder conditions on c only, so z is not materialized.
    """
    del sample
    B, T, _ = p.shape
    N = inputs.shape[1]
    H = packed["w32"].shape[1]

    if t_tile is None:
        t_tile = T
        for cand in (2048, 1024, 512, 256, 128):   # budget vs. v7x 64 MiB VMEM is trivial here
            if T % cand == 0:
                t_tile = cand
                break
    assert T % t_tile == 0, "T must be a multiple of the T tile"
    nT = T // t_tile

    # Layout plumbing: put the point/query axis on the 128-lane axis.
    pT = jnp.swapaxes(p, 1, 2)            # (B, 3, T)
    xT = jnp.swapaxes(inputs, 1, 2)       # (B, 3, N)

    logits3 = pl.pallas_call(
        fused_onet_kernel,
        out_shape=jax.ShapeDtypeStruct((B, 1, T), jnp.float32),
        grid_spec=pltpu.PrefetchScalarGridSpec(
            num_scalar_prefetch=0,
            grid=(B, nT),
            in_specs=[
                pl.BlockSpec((1, 3, t_tile), lambda b, tj: (b, 0, tj)),
                pl.BlockSpec((1, 3, N), lambda b, tj: (b, 0, 0)),
                # Weights: constant index_map -> VMEM-resident across the grid.
                pl.BlockSpec(packed["w3"].shape, lambda b, tj: (0, 0, 0)),
                pl.BlockSpec(packed["w32"].shape, lambda b, tj: (0, 0, 0)),
                pl.BlockSpec(packed["woutT"].shape, lambda b, tj: (0, 0)),
                pl.BlockSpec(packed["bias"].shape, lambda b, tj: (0, 0)),
                pl.BlockSpec(packed["bout"].shape, lambda b, tj: (0, 0)),
            ],
            out_specs=pl.BlockSpec((1, 1, t_tile), lambda b, tj: (b, 0, tj)),
            scratch_shapes=[pltpu.VMEM((2, H, 1), jnp.float32)],
        ),
        compiler_params=pltpu.CompilerParams(
            # B is independent -> "parallel" (shards across v7x's 2 TCs);
            # T carries the encoder/conditioning scratch -> "arbitrary".
            dimension_semantics=("parallel", "arbitrary")),
    )(pT, xT, packed["w3"], packed["w32"], packed["woutT"],
      packed["bias"], packed["bout"])

    logits = logits3[:, 0, :]                                         # (B, T)
    probs = jax.nn.sigmoid(logits)                                    # Bernoulli(logits).probs
    return logits, probs


# ----------------------------------------------------------------------------
# Parameter construction & packing (transpose + stack for the fused kernel)
# ----------------------------------------------------------------------------
def make_params(key, hidden=32, c_dim=32):
    ks = jax.random.split(key, 20)
    s = 0.1
    return {
        "enc_w1": s * jax.random.normal(ks[0], (3, hidden), jnp.float32),
        "enc_b1": s * jax.random.normal(ks[1], (1, hidden), jnp.float32),
        "enc_w2": s * jax.random.normal(ks[2], (hidden, c_dim), jnp.float32),
        "enc_b2": s * jax.random.normal(ks[3], (1, c_dim), jnp.float32),
        "dec_wp": s * jax.random.normal(ks[4], (3, hidden), jnp.float32),
        "dec_bp": s * jax.random.normal(ks[5], (1, hidden), jnp.float32),
        "dec_wc0": s * jax.random.normal(ks[6], (c_dim, hidden), jnp.float32),
        "dec_bc0": s * jax.random.normal(ks[7], (1, hidden), jnp.float32),
        "dec_w00": s * jax.random.normal(ks[8], (hidden, hidden), jnp.float32),
        "dec_b00": s * jax.random.normal(ks[9], (1, hidden), jnp.float32),
        "dec_w01": s * jax.random.normal(ks[10], (hidden, hidden), jnp.float32),
        "dec_b01": s * jax.random.normal(ks[11], (1, hidden), jnp.float32),
        "dec_wc1": s * jax.random.normal(ks[12], (c_dim, hidden), jnp.float32),
        "dec_bc1": s * jax.random.normal(ks[13], (1, hidden), jnp.float32),
        "dec_w10": s * jax.random.normal(ks[14], (hidden, hidden), jnp.float32),
        "dec_b10": s * jax.random.normal(ks[15], (1, hidden), jnp.float32),
        "dec_w11": s * jax.random.normal(ks[16], (hidden, hidden), jnp.float32),
        "dec_b11": s * jax.random.normal(ks[17], (1, hidden), jnp.float32),
        "dec_wout": s * jax.random.normal(ks[18], (hidden, 1), jnp.float32),
        "dec_bout": s * jax.random.normal(ks[19], (1, 1), jnp.float32),
    }


def pack_params(params):
    """Transpose + stack raw (PyTorch-layout) params for the fused kernel."""
    H = params["enc_w1"].shape[1]
    C = params["enc_w2"].shape[1]
    assert H == C, "packing assumes hidden == c_dim (true for this config)"
    w3 = jnp.stack([params["enc_w1"].T, params["dec_wp"].T])          # (2, H, 3)
    w32 = jnp.stack([params["enc_w2"].T,
                     params["dec_wc0"].T, params["dec_w00"].T, params["dec_w01"].T,
                     params["dec_wc1"].T, params["dec_w10"].T, params["dec_w11"].T])  # (7,H,H)
    woutT = params["dec_wout"].T                                      # (1, H)
    bias = jnp.stack([params["enc_b1"][0], params["enc_b2"][0], params["dec_bp"][0],
                      params["dec_bc0"][0], params["dec_b00"][0], params["dec_b01"][0],
                      params["dec_bc1"][0], params["dec_b10"][0], params["dec_b11"][0]],
                     axis=1)                                          # (H, 9)
    bout = params["dec_bout"]                                         # (1, 1)
    return {"w3": w3, "w32": w32, "woutT": woutT, "bias": bias, "bout": bout}


# ----------------------------------------------------------------------------
# Pure-JAX reference (original, untransposed layout) for correctness check
# ----------------------------------------------------------------------------
def forward_ref(p, inputs, params):
    h = jax.nn.relu(inputs @ params["enc_w1"] + params["enc_b1"])
    h = h @ params["enc_w2"] + params["enc_b2"]
    c = jnp.max(h, axis=1, keepdims=True)                             # (B, 1, C)

    net = p @ params["dec_wp"] + params["dec_bp"]

    def blk(net, wc, bc, w0, b0, w1, b1):
        net = net + (c @ wc + bc)
        hh = jax.nn.relu(net) @ w0 + b0
        dx = jax.nn.relu(hh) @ w1 + b1
        return net + dx

    net = blk(net, params["dec_wc0"], params["dec_bc0"],
              params["dec_w00"], params["dec_b00"],
              params["dec_w01"], params["dec_b01"])
    net = blk(net, params["dec_wc1"], params["dec_bc1"],
              params["dec_w10"], params["dec_b10"],
              params["dec_w11"], params["dec_b11"])
    logits = (jax.nn.relu(net) @ params["dec_wout"] + params["dec_bout"])[..., 0]
    return logits


# ----------------------------------------------------------------------------
if __name__ == "__main__":
    key = jax.random.PRNGKey(0)
    k_p, k_in, k_par = jax.random.split(key, 3)

    B, T, N = 2, 256, 128          # batch, query points, input points
    hidden = c_dim = 32

    p = jax.random.uniform(k_p, (B, T, 3), jnp.float32, -0.5, 0.5)        # query points
    inputs = jax.random.uniform(k_in, (B, N, 3), jnp.float32, -0.5, 0.5)  # point cloud
    params = make_params(k_par, hidden=hidden, c_dim=c_dim)
    packed = pack_params(params)

    # t_tile=128 exercises the multi-tile T path (c + conditioning cached in scratch).
    fwd = jax.jit(lambda p_, x_: forward(p_, x_, packed, t_tile=128))
    logits, probs = fwd(p, inputs)
    jax.block_until_ready((logits, probs))

    # correctness check vs. pure-JAX reference
    ref_logits = forward_ref(p, inputs, params)
    assert logits.shape == (B, T) and probs.shape == (B, T)
    assert jnp.allclose(logits, ref_logits, atol=1e-4, rtol=1e-4)
    assert jnp.allclose(probs, jax.nn.sigmoid(ref_logits), atol=1e-4, rtol=1e-4)

    # TODO(synk): the semantic_map encoder branch and the dynamic plane-parameter
    # prediction head of the full encoder are orthogonal to this wrapper's hot
    # path and are not reproduced here. If N is ever tiled over the grid, the
    # encoder max-pool must become a -inf-initialized scratch accumulator.
    print("KERNEL_OK")
</pallas_src>

<mosaic_0001>
module attributes {stable_mosaic.version = 11 : i64} {
  func.func @fused_onet_kernel(%arg0: i32, %arg1: i32, %arg2: memref<1x3x128xf32, #tpu.memory_space<vmem>>, %arg3: memref<1x3x128xf32, #tpu.memory_space<vmem>>, %arg4: memref<2x32x3xf32, #tpu.memory_space<vmem>>, %arg5: memref<7x32x32xf32, #tpu.memory_space<vmem>>, %arg6: memref<1x32xf32, #tpu.memory_space<vmem>>, %arg7: memref<32x9xf32, #tpu.memory_space<vmem>>, %arg8: memref<1x1xf32, #tpu.memory_space<vmem>>, %arg9: memref<1x1x128xf32, #tpu.memory_space<vmem>>, %arg10: memref<2x32x1xf32, #tpu.memory_space<vmem>>) attributes {dimension_semantics = [#tpu.dimension_semantics<parallel>, #tpu.dimension_semantics<arbitrary>], iteration_bounds = array<i64: 2, 2>, scalar_prefetch = 0 : i64, scratch_operands = 1 : i64, tpu.core_type = #tpu.core_type<tc>, window_params = [{transform_indices = @transform_0, window_bounds = array<i64: 1, 3, 128>}, {transform_indices = @transform_1, window_bounds = array<i64: 1, 3, 128>}, {pipeline_mode = #tpu.pipeline_mode<synchronous>, transform_indices = @transform_2, window_bounds = array<i64: 2, 32, 3>}, {pipeline_mode = #tpu.pipeline_mode<synchronous>, transform_indices = @transform_3, window_bounds = array<i64: 7, 32, 32>}, {pipeline_mode = #tpu.pipeline_mode<synchronous>, transform_indices = @transform_4, window_bounds = array<i64: 1, 32>}, {pipeline_mode = #tpu.pipeline_mode<synchronous>, transform_indices = @transform_5, window_bounds = array<i64: 32, 9>}, {pipeline_mode = #tpu.pipeline_mode<synchronous>, transform_indices = @transform_6, window_bounds = array<i64: 1, 1>}, {transform_indices = @transform_7, window_bounds = array<i64: 1, 1, 128>}]} {
    %c0_i32 = arith.constant 0 : i32
    %0 = arith.cmpi eq, %arg1, %c0_i32 : i32
    %1 = arith.extui %0 : i1 to i32
    %c0_i32_0 = arith.constant 0 : i32
    %2 = arith.cmpi ne, %1, %c0_i32_0 : i32
    scf.if %2 {
      %c0_43 = arith.constant 0 : index
      %c0_44 = arith.constant 0 : index
      %c0_45 = arith.constant 0 : index
      %63 = vector.load %arg3[%c0_43, %c0_44, %c0_45] : memref<1x3x128xf32, #tpu.memory_space<vmem>>, vector<1x3x128xf32>
      %64 = vector.shape_cast %63 : vector<1x3x128xf32> to vector<3x128xf32>
      %c0_46 = arith.constant 0 : index
      %c0_47 = arith.constant 0 : index
      %c0_48 = arith.constant 0 : index
      %65 = vector.load %arg4[%c0_46, %c0_47, %c0_48] : memref<2x32x3xf32, #tpu.memory_space<vmem>>, vector<1x32x3xf32>
      %66 = vector.shape_cast %65 : vector<1x32x3xf32> to vector<32x3xf32>
      %cst_49 = arith.constant dense<0.000000e+00> : vector<32x128xf32>
      %67 = tpu.matmul %66, %64, %cst_49 {dimension_numbers = #tpu.dot_dimension_numbers<[1], [0], [0], [1], [0, 0, 1, 1], [], []>} : vector<32x3xf32>, vector<3x128xf32>, vector<32x128xf32> -> vector<32x128xf32>
      %c0_50 = arith.constant 0 : index
      %c0_51 = arith.constant 0 : index
      %68 = vector.load %arg7[%c0_50, %c0_51] : memref<32x9xf32, #tpu.memory_space<vmem>>, vector<32x1xf32>
      %69 = vector.broadcast %68 : vector<32x1xf32> to vector<32x128xf32>
      %70 = arith.addf %67, %69 : vector<32x128xf32>
      %cst_52 = arith.constant 0.000000e+00 : f32
      %71 = vector.broadcast %cst_52 : f32 to vector<32x128xf32>
      %72 = arith.maximumf %70, %71 : vector<32x128xf32>
      %c0_53 = arith.constant 0 : index
      %c0_54 = arith.constant 0 : index
      %c0_55 = arith.constant 0 : index
      %73 = vector.load %arg5[%c0_53, %c0_54, %c0_55] : memref<7x32x32xf32, #tpu.memory_space<vmem>>, vector<1x32x32xf32>
      %74 = vector.shape_cast %73 : vector<1x32x32xf32> to vector<32x32xf32>
      %cst_56 = arith.constant dense<0.000000e+00> : vector<32x128xf32>
      %75 = tpu.matmul %74, %72, %cst_56 {dimension_numbers = #tpu.dot_dimension_numbers<[1], [0], [0], [1], [0, 0, 1, 1], [], []>} : vector<32x32xf32>, vector<32x128xf32>, vector<32x128xf32> -> vector<32x128xf32>
      %c0_57 = arith.constant 0 : index
      %c1_58 = arith.constant 1 : index
      %76 = vector.load %arg7[%c0_57, %c1_58] : memref<32x9xf32, #tpu.memory_space<vmem>>, vector<32x1xf32>
      %77 = vector.broadcast %76 : vector<32x1xf32> to vector<32x128xf32>
      %78 = arith.addf %75, %77 : vector<32x128xf32>
      %cst_59 = arith.constant dense<0xFF800000> : vector<32xf32>
      %79 = vector.multi_reduction <maximumf>, %78, %cst_59 [1] : vector<32x128xf32> to vector<32xf32>
      %80 = vector.shape_cast %79 : vector<32xf32> to vector<32x1xf32>
      %c1_60 = arith.constant 1 : index
      %c0_61 = arith.constant 0 : index
      %c0_62 = arith.constant 0 : index
      %81 = vector.load %arg5[%c1_60, %c0_61, %c0_62] : memref<7x32x32xf32, #tpu.memory_space<vmem>>, vector<1x32x32xf32>
      %82 = vector.shape_cast %81 : vector<1x32x32xf32> to vector<32x32xf32>
      %cst_63 = arith.constant dense<0.000000e+00> : vector<32x1xf32>
      %83 = tpu.matmul %82, %80, %cst_63 {dimension_numbers = #tpu.dot_dimension_numbers<[1], [0], [0], [1], [0, 0, 1, 1], [], []>} : vector<32x32xf32>, vector<32x1xf32>, vector<32x1xf32> -> vector<32x1xf32>
      %c0_64 = arith.constant 0 : index
      %c3_65 = arith.constant 3 : index
      %84 = vector.load %arg7[%c0_64, %c3_65] : memref<32x9xf32, #tpu.memory_space<vmem>>, vector<32x1xf32>
      %85 = arith.addf %83, %84 : vector<32x1xf32>
      %c0_66 = arith.constant 0 : index
      %c0_67 = arith.constant 0 : index
      %c0_68 = arith.constant 0 : index
      %86 = vector.load %arg10[%c0_66, %c0_67, %c0_68] : memref<2x32x1xf32, #tpu.memory_space<vmem>>, vector<1x32x1xf32>
      %87 = vector.shape_cast %86 : vector<1x32x1xf32> to vector<32x1xf32>
      %88 = vector.shape_cast %85 : vector<32x1xf32> to vector<1x32x1xf32>
      tpu.vector_store %arg10[%c0_66, %c0_67, %c0_68], %88 {strides = array<i32>} : memref<2x32x1xf32, #tpu.memory_space<vmem>>, vector<1x32x1xf32>,
      %c4_69 = arith.constant 4 : index
      %c0_70 = arith.constant 0 : index
      %c0_71 = arith.constant 0 : index
      %89 = vector.load %arg5[%c4_69, %c0_70, %c0_71] : memref<7x32x32xf32, #tpu.memory_space<vmem>>, vector<1x32x32xf32>
      %90 = vector.shape_cast %89 : vector<1x32x32xf32> to vector<32x32xf32>
      %cst_72 = arith.constant dense<0.000000e+00> : vector<32x1xf32>
      %91 = tpu.matmul %90, %80, %cst_72 {dimension_numbers = #tpu.dot_dimension_numbers<[1], [0], [0], [1], [0, 0, 1, 1], [], []>} : vector<32x32xf32>, vector<32x1xf32>, vector<32x1xf32> -> vector<32x1xf32>
      %c0_73 = arith.constant 0 : index
      %c6_74 = arith.constant 6 : index
      %92 = vector.load %arg7[%c0_73, %c6_74] : memref<32x9xf32, #tpu.memory_space<vmem>>, vector<32x1xf32>
      %93 = arith.addf %91, %92 : vector<32x1xf32>
      %c1_75 = arith.constant 1 : index
      %c0_76 = arith.constant 0 : index
      %c0_77 = arith.constant 0 : index
      %94 = vector.load %arg10[%c1_75, %c0_76, %c0_77] : memref<2x32x1xf32, #tpu.memory_space<vmem>>, vector<1x32x1xf32>
      %95 = vector.shape_cast %94 : vector<1x32x1xf32> to vector<32x1xf32>
      %96 = vector.shape_cast %93 : vector<32x1xf32> to vector<1x32x1xf32>
      tpu.vector_store %arg10[%c1_75, %c0_76, %c0_77], %96 {strides = array<i32>} : memref<2x32x1xf32, #tpu.memory_space<vmem>>, vector<1x32x1xf32>,
    } else {
    }
    %c0 = arith.constant 0 : index
    %c0_1 = arith.constant 0 : index
    %c0_2 = arith.constant 0 : index
    %3 = vector.load %arg2[%c0, %c0_1, %c0_2] : memref<1x3x128xf32, #tpu.memory_space<vmem>>, vector<1x3x128xf32>
    %4 = vector.shape_cast %3 : vector<1x3x128xf32> to vector<3x128xf32>
    %c1 = arith.constant 1 : index
    %c0_3 = arith.constant 0 : index
    %c0_4 = arith.constant 0 : index
    %5 = vector.load %arg4[%c1, %c0_3, %c0_4] : memref<2x32x3xf32, #tpu.memory_space<vmem>>, vector<1x32x3xf32>
    %6 = vector.shape_cast %5 : vector<1x32x3xf32> to vector<32x3xf32>
    %cst = arith.constant dense<0.000000e+00> : vector<32x128xf32>
    %7 = tpu.matmul %6, %4, %cst {dimension_numbers = #tpu.dot_dimension_numbers<[1], [0], [0], [1], [0, 0, 1, 1], [], []>} : vector<32x3xf32>, vector<3x128xf32>, vector<32x128xf32> -> vector<32x128xf32>
    %c0_5 = arith.constant 0 : index
    %c2 = arith.constant 2 : index
    %8 = vector.load %arg7[%c0_5, %c2] : memref<32x9xf32, #tpu.memory_space<vmem>>, vector<32x1xf32>
    %9 = vector.broadcast %8 : vector<32x1xf32> to vector<32x128xf32>
    %10 = arith.addf %7, %9 : vector<32x128xf32>
    %c0_6 = arith.constant 0 : index
    %c0_7 = arith.constant 0 : index
    %c0_8 = arith.constant 0 : index
    %11 = vector.load %arg10[%c0_6, %c0_7, %c0_8] : memref<2x32x1xf32, #tpu.memory_space<vmem>>, vector<1x32x1xf32>
    %12 = vector.shape_cast %11 : vector<1x32x1xf32> to vector<32x1xf32>
    %c2_9 = arith.constant 2 : index
    %c0_10 = arith.constant 0 : index
    %c0_11 = arith.constant 0 : index
    %13 = vector.load %arg5[%c2_9, %c0_10, %c0_11] : memref<7x32x32xf32, #tpu.memory_space<vmem>>, vector<1x32x32xf32>
    %14 = vector.shape_cast %13 : vector<1x32x32xf32> to vector<32x32xf32>
    %c0_12 = arith.constant 0 : index
    %c4 = arith.constant 4 : index
    %15 = vector.load %arg7[%c0_12, %c4] : memref<32x9xf32, #tpu.memory_space<vmem>>, vector<32x1xf32>
    %c3 = arith.constant 3 : index
    %c0_13 = arith.constant 0 : index
    %c0_14 = arith.constant 0 : index
    %16 = vector.load %arg5[%c3, %c0_13, %c0_14] : memref<7x32x32xf32, #tpu.memory_space<vmem>>, vector<1x32x32xf32>
    %17 = vector.shape_cast %16 : vector<1x32x32xf32> to vector<32x32xf32>
    %c0_15 = arith.constant 0 : index
    %c5 = arith.constant 5 : index
    %18 = vector.load %arg7[%c0_15, %c5] : memref<32x9xf32, #tpu.memory_space<vmem>>, vector<32x1xf32>
    %19 = vector.broadcast %12 : vector<32x1xf32> to vector<32x128xf32>
    %20 = arith.addf %10, %19 : vector<32x128xf32>
    %cst_16 = arith.constant 0.000000e+00 : f32
    %21 = vector.broadcast %cst_16 : f32 to vector<32x128xf32>
    %22 = arith.maximumf %20, %21 : vector<32x128xf32>
    %cst_17 = arith.constant dense<0.000000e+00> : vector<32x128xf32>
    %23 = tpu.matmul %14, %22, %cst_17 {dimension_numbers = #tpu.dot_dimension_numbers<[1], [0], [0], [1], [0, 0, 1, 1], [], []>} : vector<32x32xf32>, vector<32x128xf32>, vector<32x128xf32> -> vector<32x128xf32>
    %24 = vector.broadcast %15 : vector<32x1xf32> to vector<32x128xf32>
    %25 = arith.addf %23, %24 : vector<32x128xf32>
    %cst_18 = arith.constant 0.000000e+00 : f32
    %26 = vector.broadcast %cst_18 : f32 to vector<32x128xf32>
    %27 = arith.maximumf %25, %26 : vector<32x128xf32>
    %cst_19 = arith.constant dense<0.000000e+00> : vector<32x128xf32>
    %28 = tpu.matmul %17, %27, %cst_19 {dimension_numbers = #tpu.dot_dimension_numbers<[1], [0], [0], [1], [0, 0, 1, 1], [], []>} : vector<32x32xf32>, vector<32x128xf32>, vector<32x128xf32> -> vector<32x128xf32>
    %29 = vector.broadcast %18 : vector<32x1xf32> to vector<32x128xf32>
    %30 = arith.addf %28, %29 : vector<32x128xf32>
    %31 = arith.addf %20, %30 : vector<32x128xf32>
    %c1_20 = arith.constant 1 : index
    %c0_21 = arith.constant 0 : index
    %c0_22 = arith.constant 0 : index
    %32 = vector.load %arg10[%c1_20, %c0_21, %c0_22] : memref<2x32x1xf32, #tpu.memory_space<vmem>>, vector<1x32x1xf32>
    %33 = vector.shape_cast %32 : vector<1x32x1xf32> to vector<32x1xf32>
    %c5_23 = arith.constant 5 : index
    %c0_24 = arith.constant 0 : index
    %c0_25 = arith.constant 0 : index
    %34 = vector.load %arg5[%c5_23, %c0_24, %c0_25] : memref<7x32x32xf32, #tpu.memory_space<vmem>>, vector<1x32x32xf32>
    %35 = vector.shape_cast %34 : vector<1x32x32xf32> to vector<32x32xf32>
    %c0_26 = arith.constant 0 : index
    %c7 = arith.constant 7 : index
    %36 = vector.load %arg7[%c0_26, %c7] : memref<32x9xf32, #tpu.memory_space<vmem>>, vector<32x1xf32>
    %c6 = arith.constant 6 : index
    %c0_27 = arith.constant 0 : index
    %c0_28 = arith.constant 0 : index
    %37 = vector.load %arg5[%c6, %c0_27, %c0_28] : memref<7x32x32xf32, #tpu.memory_space<vmem>>, vector<1x32x32xf32>
    %38 = vector.shape_cast %37 : vector<1x32x32xf32> to vector<32x32xf32>
    %c0_29 = arith.constant 0 : index
    %c8 = arith.constant 8 : index
    %39 = vector.load %arg7[%c0_29, %c8] : memref<32x9xf32, #tpu.memory_space<vmem>>, vector<32x1xf32>
    %40 = vector.broadcast %33 : vector<32x1xf32> to vector<32x128xf32>
    %41 = arith.addf %31, %40 : vector<32x128xf32>
    %cst_30 = arith.constant 0.000000e+00 : f32
    %42 = vector.broadcast %cst_30 : f32 to vector<32x128xf32>
    %43 = arith.maximumf %41, %42 : vector<32x128xf32>
    %cst_31 = arith.constant dense<0.000000e+00> : vector<32x128xf32>
    %44 = tpu.matmul %35, %43, %cst_31 {dimension_numbers = #tpu.dot_dimension_numbers<[1], [0], [0], [1], [0, 0, 1, 1], [], []>} : vector<32x32xf32>, vector<32x128xf32>, vector<32x128xf32> -> vector<32x128xf32>
    %45 = vector.broadcast %36 : vector<32x1xf32> to vector<32x128xf32>
    %46 = arith.addf %44, %45 : vector<32x128xf32>
    %cst_32 = arith.constant 0.000000e+00 : f32
    %47 = vector.broadcast %cst_32 : f32 to vector<32x128xf32>
    %48 = arith.maximumf %46, %47 : vector<32x128xf32>
    %cst_33 = arith.constant dense<0.000000e+00> : vector<32x128xf32>
    %49 = tpu.matmul %38, %48, %cst_33 {dimension_numbers = #tpu.dot_dimension_numbers<[1], [0], [0], [1], [0, 0, 1, 1], [], []>} : vector<32x32xf32>, vector<32x128xf32>, vector<32x128xf32> -> vector<32x128xf32>
    %50 = vector.broadcast %39 : vector<32x1xf32> to vector<32x128xf32>
    %51 = arith.addf %49, %50 : vector<32x128xf32>
    %52 = arith.addf %41, %51 : vector<32x128xf32>
    %c0_34 = arith.constant 0 : index
    %c0_35 = arith.constant 0 : index
    %53 = vector.load %arg6[%c0_34, %c0_35] : memref<1x32xf32, #tpu.memory_space<vmem>>, vector<1x32xf32>
    %cst_36 = arith.constant 0.000000e+00 : f32
    %54 = vector.broadcast %cst_36 : f32 to vector<32x128xf32>
    %55 = arith.maximumf %52, %54 : vector<32x128xf32>
    %cst_37 = arith.constant dense<0.000000e+00> : vector<1x128xf32>
    %56 = tpu.matmul %53, %55, %cst_37 {dimension_numbers = #tpu.dot_dimension_numbers<[1], [0], [0], [1], [0, 0, 1, 1], [], []>} : vector<1x32xf32>, vector<32x128xf32>, vector<1x128xf32> -> vector<1x128xf32>
    %c0_38 = arith.constant 0 : index
    %c0_39 = arith.constant 0 : index
    %57 = vector.load %arg8[%c0_38, %c0_39] : memref<1x1xf32, #tpu.memory_space<vmem>>, vector<1x1xf32>
    %58 = vector.broadcast %57 : vector<1x1xf32> to vector<1x128xf32>
    %59 = arith.addf %56, %58 : vector<1x128xf32>
    %c0_40 = arith.constant 0 : index
    %c0_41 = arith.constant 0 : index
    %c0_42 = arith.constant 0 : index
    %60 = vector.load %arg9[%c0_40, %c0_41, %c0_42] : memref<1x1x128xf32, #tpu.memory_space<vmem>>, vector<1x1x128xf32>
    %61 = vector.shape_cast %60 : vector<1x1x128xf32> to vector<1x128xf32>
    %62 = vector.shape_cast %59 : vector<1x128xf32> to vector<1x1x128xf32>
    tpu.vector_store %arg9[%c0_40, %c0_41, %c0_42], %62 {strides = array<i32>} : memref<1x1x128xf32, #tpu.memory_space<vmem>>, vector<1x1x128xf32>,
    return
  }
  func.func @transform_0(%arg0: i32, %arg1: i32) -> (i32, i32, i32) {
    %c0_i32 = arith.constant 0 : i32
    %c0_i32_0 = arith.constant 0 : i32
    return %arg0, %c0_i32, %arg1 : i32, i32, i32
  }
  func.func @transform_1(%arg0: i32, %arg1: i32) -> (i32, i32, i32) {
    %c0_i32 = arith.constant 0 : i32
    %c0_i32_0 = arith.constant 0 : i32
    %c0_i32_1 = arith.constant 0 : i32
    return %arg0, %c0_i32, %c0_i32_0 : i32, i32, i32
  }
  func.func @transform_2(%arg0: i32, %arg1: i32) -> (i32, i32, i32) {
    %c0_i32 = arith.constant 0 : i32
    %c0_i32_0 = arith.constant 0 : i32
    %c0_i32_1 = arith.constant 0 : i32
    %c0_i32_2 = arith.constant 0 : i32
    return %c0_i32, %c0_i32_0, %c0_i32_1 : i32, i32, i32
  }
  func.func @transform_3(%arg0: i32, %arg1: i32) -> (i32, i32, i32) {
    %c0_i32 = arith.constant 0 : i32
    %c0_i32_0 = arith.constant 0 : i32
    %c0_i32_1 = arith.constant 0 : i32
    %c0_i32_2 = arith.constant 0 : i32
    return %c0_i32, %c0_i32_0, %c0_i32_1 : i32, i32, i32
  }
  func.func @transform_4(%arg0: i32, %arg1: i32) -> (i32, i32) {
    %c0_i32 = arith.constant 0 : i32
    %c0_i32_0 = arith.constant 0 : i32
    %c0_i32_1 = arith.constant 0 : i32
    return %c0_i32, %c0_i32_0 : i32, i32
  }
  func.func @transform_5(%arg0: i32, %arg1: i32) -> (i32, i32) {
    %c0_i32 = arith.constant 0 : i32
    %c0_i32_0 = arith.constant 0 : i32
    %c0_i32_1 = arith.constant 0 : i32
    return %c0_i32, %c0_i32_0 : i32, i32
  }
  func.func @transform_6(%arg0: i32, %arg1: i32) -> (i32, i32) {
    %c0_i32 = arith.constant 0 : i32
    %c0_i32_0 = arith.constant 0 : i32
    %c0_i32_1 = arith.constant 0 : i32
    return %c0_i32, %c0_i32_0 : i32, i32
  }
  func.func @transform_7(%arg0: i32, %arg1: i32) -> (i32, i32, i32) {
    %c0_i32 = arith.constant 0 : i32
    %c0_i32_0 = arith.constant 0 : i32
    return %arg0, %c0_i32, %arg1 : i32, i32, i32
  }
}

</mosaic_0001>

<llo_original>
// kernel: _lambda_.1
$region0: #{_lambda_.1}
  #allocation0 [shape = 'u32[]', space=smem, size = 0x4, offset = 0x4, fixed_abs, tag = 'smem constant byte address 0x4 - core index']
  #allocation1 [shape = 'u32[144,128]{1,0:T(1,128)}', space=vmem, size = 0x12000, scoped, tag = 'internal scratch']
  #allocation2 [shape = 'f32[2,32,1]{2,1,0:T(8,128)}', space=vmem, size = 0x8000, scoped, tag = 'scratch operand']
  #allocation3 [shape = 'f32[1,1]{1,0:T(1,128)S(1)}', space=vmem, size = 0x200, scoped, tag = 'scoped memory for _lambda_.1']
  %s0 = inlined_call_operand.vmem [shape: f32[2,3,256], index: 0, kind: input, shape index: {}]
  %s1 = inlined_call_operand.vmem [shape: f32[2,3,128], index: 1, kind: input, shape index: {}]
  %s2 = inlined_call_operand.hbm [shape: f32[2,32,3], index: 2, kind: input, shape index: {}]
  %s3 = inlined_call_operand.hbm [shape: f32[7,32,32], index: 3, kind: input, shape index: {}]
  %s4 = inlined_call_operand.vmem [shape: f32[1,32], index: 4, kind: input, shape index: {}]
  %s5 = inlined_call_operand.vmem [shape: f32[32,9], index: 5, kind: input, shape index: {}]
  %s6 = inlined_call_operand.<no memory space> [shape: f32[1,1], index: 6, kind: input, shape index: {}]
  %s7 = inlined_call_operand.vmem [shape: f32[2,1,256], index: 7, kind: output, shape index: {}]
  %s8 = sld [smem:[#allocation0]]
  $region73: #{_lambda_.1} parent=0
    _
  %s10 = ssub.s32 1, %s8
  %s11 = scalar_select 0, %s10, %s8
  %v12 = vstv %s6
  %13 = vst [vmem:[#allocation3] sm:$0x1] %v12
  $region1: #{_lambda_.1} parent=0
    #allocation4 [shape = 'u8[32768]{0}', space=vmem, size = 0x8000, scoped, tag = 'input window, operand 2, single buffered']
    #allocation5 [shape = 's32[2]{0}', space=sflag, size = 0x8, scoped, tag = 'scoped memory for _lambda_.1']
    #allocation6 [shape = 'u8[114688]{0}', space=vmem, size = 0x1c000, scoped, tag = 'input window, operand 3, single buffered']
    #allocation7 [shape = 's32[1]{0}', space=sflag, size = 0x4, scoped, tag = 'scoped memory for _lambda_.1']
    %14 = vsyncpa [#allocation5], 0
    %15 = vsyncpa [#allocation7], 0
    loop: start=0, step=1, limit=6
    $region2: #{_lambda_.1} parent=1 // loop_pre_header
      _
    $region3: #{_lambda_.1} parent=1 // loop_header
      %s17 = sphi 0, %s21
      %p18 = scmp.ge.s32.totalorder %s17, 6
      %s24 = sphi 0, %s36
      %s25 = sphi 0, %s32
      %s26 = sphi 0, %s24
      %s27 = sphi 0, %s25
      %s28 = sphi 0, %s26
      %s29 = sphi 0, %s27
      %s41 = sphi 0, %s43
      %s44 = sphi 0, %s41
      %s45 = sphi 0, %s44
      %s61 = sphi 0, %s45
      %s67 = sphi 0, %s69
      %s70 = sphi 0, %s67
      %s71 = sphi 0, %s70
      %s87 = sphi 0, %s71
      %s91 = sphi 0, %s91
      %s93 = sphi 0, %s91
      %s94 = sphi 0, %s93
      %s108 = sphi 0, %s94
      %s112 = sphi 0, %s112
      %s114 = sphi 0, %s112
      %s115 = sphi 0, %s114
      %s129 = sphi 0, %s115
      %s133 = sphi 0, %s133
      %s135 = sphi 0, %s133
      %s136 = sphi 0, %s135
      %s150 = sphi 0, %s136
      %s154 = sphi 0, %s154
      %s156 = sphi 0, %s154
      %s157 = sphi 0, %s156
      %s171 = sphi 0, %s157
      %s175 = sphi 0, %s175
      %s177 = sphi 0, %s175
      %s178 = sphi 0, %s177
      %s192 = sphi 0, %s178
      %s200 = sphi 0, %s202
      %s203 = sphi 0, %s200
      %s204 = sphi 0, %s203
      %s220 = sphi 0, %s204
    $region4: #{_lambda_.1} parent=1 // loop_header_branch
      %20 = sbr.rel (%p18) target = $region8
    $region5: #{_lambda_.1} parent=1 // loop_body
      %s22 = ssub.s32 %s17, 1
      %s23 = ssub.s32 %s17, 2
      %s30 = sadd.s32 1, %s25
      %p31 = scmp.ge.s32.totalorder %s30, 2
      %s32 = scalar_select %p31, 0, %s30
      %s33 = sadd.s32 1, %s24
      %s34 = scalar_select %p31, %s33, %s24
      %p35 = scmp.ge.s32.totalorder %s34, 2
      %s36 = scalar_select %p35, 0, %s34
      %s37 = ssub.s32 %s24, %s36
      %s38 = ssub.s32 %s25, %s32
      %s39 = sor.u32 %s37, %s38
      %p40 = scmp.eq.s32.totalorder %s39, 0
      %s42 = sadd.s32 %s41, 1
      %s43 = scalar_select %p40, %s41, %s42
      %p46 = pneg %p40
      %p47 = scmp.eq.s32.totalorder %s17, 3
      %p48 = por %p46, %p47
      %p49 = scmp.ne.s32.totalorder %s41, %s44
      %p50 = scmp.eq.s32.totalorder %s17, 0
      %p51 = por %p49, %p50
      %p52 = scmp.ne.s32.totalorder %s41, %s44
      %p53 = scmp.eq.s32.totalorder %s22, 3
      %p54 = por %p52, %p53
      %p55 = scmp.ne.s32.totalorder %s44, %s45
      %p56 = scmp.eq.s32.totalorder %s22, 0
      %p57 = por %p55, %p56
      %p58 = scmp.ne.s32.totalorder %s44, %s45
      %p59 = scmp.eq.s32.totalorder %s23, 3
      %p60 = por %p58, %p59
      %p62 = scmp.ne.s32.totalorder %s45, %s61
      %p63 = scmp.eq.s32.totalorder %s23, 0
      %p64 = por %p62, %p63
      %s65 = ssub.s32 %s24, %s36
      %p66 = scmp.eq.s32.totalorder %s65, 0
      %s68 = sadd.s32 %s67, 1
      %s69 = scalar_select %p66, %s67, %s68
      %p72 = pneg %p66
      %p73 = scmp.eq.s32.totalorder %s17, 3
      %p74 = por %p72, %p73
      %p75 = scmp.ne.s32.totalorder %s67, %s70
      %p76 = scmp.eq.s32.totalorder %s17, 0
      %p77 = por %p75, %p76
      %p78 = scmp.ne.s32.totalorder %s67, %s70
      %p79 = scmp.eq.s32.totalorder %s22, 3
      %p80 = por %p78, %p79
      %p81 = scmp.ne.s32.totalorder %s70, %s71
      %p82 = scmp.eq.s32.totalorder %s22, 0
      %p83 = por %p81, %p82
      %p84 = scmp.ne.s32.totalorder %s70, %s71
      %p85 = scmp.eq.s32.totalorder %s23, 3
      %p86 = por %p84, %p85
      %p88 = scmp.ne.s32.totalorder %s71, %s87
      %p89 = scmp.eq.s32.totalorder %s23, 0
      %p90 = por %p88, %p89
      %s92 = sadd.s32 %s91, 1
      %p95 = scmp.eq.s32.totalorder %s17, 3
      %p96 = scmp.ne.s32.totalorder %s91, %s93
      %p97 = scmp.eq.s32.totalorder %s17, 0
      %p98 = por %p96, %p97
      %p99 = scmp.ne.s32.totalorder %s91, %s93
      %p100 = scmp.eq.s32.totalorder %s22, 3
      %p101 = por %p99, %p100
      %p102 = scmp.ne.s32.totalorder %s93, %s94
      %p103 = scmp.eq.s32.totalorder %s22, 0
      %p104 = por %p102, %p103
      %p105 = scmp.ne.s32.totalorder %s93, %s94
      %p106 = scmp.eq.s32.totalorder %s23, 3
      %p107 = por %p105, %p106
      %p109 = scmp.ne.s32.totalorder %s94, %s108
      %p110 = scmp.eq.s32.totalorder %s23, 0
      %p111 = por %p109, %p110
      %s113 = sadd.s32 %s112, 1
      %p116 = scmp.eq.s32.totalorder %s17, 3
      %p117 = scmp.ne.s32.totalorder %s112, %s114
      %p118 = scmp.eq.s32.totalorder %s17, 0
      %p119 = por %p117, %p118
      %p120 = scmp.ne.s32.totalorder %s112, %s114
      %p121 = scmp.eq.s32.totalorder %s22, 3
      %p122 = por %p120, %p121
      %p123 = scmp.ne.s32.totalorder %s114, %s115
      %p124 = scmp.eq.s32.totalorder %s22, 0
      %p125 = por %p123, %p124
      %p126 = scmp.ne.s32.totalorder %s114, %s115
      %p127 = scmp.eq.s32.totalorder %s23, 3
      %p128 = por %p126, %p127
      %p130 = scmp.ne.s32.totalorder %s115, %s129
      %p131 = scmp.eq.s32.totalorder %s23, 0
      %p132 = por %p130, %p131
      %s134 = sadd.s32 %s133, 1
      %p137 = scmp.eq.s32.totalorder %s17, 3
      %p138 = scmp.ne.s32.totalorder %s133, %s135
      %p139 = scmp.eq.s32.totalorder %s17, 0
      %p140 = por %p138, %p139
      %p141 = scmp.ne.s32.totalorder %s133, %s135
      %p142 = scmp.eq.s32.totalorder %s22, 3
      %p143 = por %p141, %p142
      %p144 = scmp.ne.s32.totalorder %s135, %s136
      %p145 = scmp.eq.s32.totalorder %s22, 0
      %p146 = por %p144, %p145
      %p147 = scmp.ne.s32.totalorder %s135, %s136
      %p148 = scmp.eq.s32.totalorder %s23, 3
      %p149 = por %p147, %p148
      %p151 = scmp.ne.s32.totalorder %s136, %s150
      %p152 = scmp.eq.s32.totalorder %s23, 0
      %p153 = por %p151, %p152
      %s155 = sadd.s32 %s154, 1
      %p158 = scmp.eq.s32.totalorder %s17, 3
      %p159 = scmp.ne.s32.totalorder %s154, %s156
      %p160 = scmp.eq.s32.totalorder %s17, 0
      %p161 = por %p159, %p160
      %p162 = scmp.ne.s32.totalorder %s154, %s156
      %p163 = scmp.eq.s32.totalorder %s22, 3
      %p164 = por %p162, %p163
      %p165 = scmp.ne.s32.totalorder %s156, %s157
      %p166 = scmp.eq.s32.totalorder %s22, 0
      %p167 = por %p165, %p166
      %p168 = scmp.ne.s32.totalorder %s156, %s157
      %p169 = scmp.eq.s32.totalorder %s23, 3
      %p170 = por %p168, %p169
      %p172 = scmp.ne.s32.totalorder %s157, %s171
      %p173 = scmp.eq.s32.totalorder %s23, 0
      %p174 = por %p172, %p173
      %s176 = sadd.s32 %s175, 1
      %p179 = scmp.eq.s32.totalorder %s17, 3
      %p180 = scmp.ne.s32.totalorder %s175, %s177
      %p181 = scmp.eq.s32.totalorder %s17, 0
      %p182 = por %p180, %p181
      %p183 = scmp.ne.s32.totalorder %s175, %s177
      %p184 = scmp.eq.s32.totalorder %s22, 3
      %p185 = por %p183, %p184
      %p186 = scmp.ne.s32.totalorder %s177, %s178
      %p187 = scmp.eq.s32.totalorder %s22, 0
      %p188 = por %p186, %p187
      %p189 = scmp.ne.s32.totalorder %s177, %s178
      %p190 = scmp.eq.s32.totalorder %s23, 3
      %p191 = por %p189, %p190
      %p193 = scmp.ne.s32.totalorder %s178, %s192
      %p194 = scmp.eq.s32.totalorder %s23, 0
      %p195 = por %p193, %p194
      %s196 = ssub.s32 %s24, %s36
      %s197 = ssub.s32 %s25, %s32
      %s198 = sor.u32 %s196, %s197
      %p199 = scmp.eq.s32.totalorder %s198, 0
      %s201 = sadd.s32 %s200, 1
      %s202 = scalar_select %p199, %s200, %s201
      %p205 = pneg %p199
      %p206 = scmp.eq.s32.totalorder %s17, 3
      %p207 = por %p205, %p206
      %p208 = scmp.ne.s32.totalorder %s200, %s203
      %p209 = scmp.eq.s32.totalorder %s17, 0
      %p210 = por %p208, %p209
      %p211 = scmp.ne.s32.totalorder %s200, %s203
      %p212 = scmp.eq.s32.totalorder %s22, 3
      %p213 = por %p211, %p212
      %p214 = scmp.ne.s32.totalorder %s203, %s204
      %p215 = scmp.eq.s32.totalorder %s22, 0
      %p216 = por %p214, %p215
      %p217 = scmp.ne.s32.totalorder %s203, %s204
      %p218 = scmp.eq.s32.totalorder %s23, 3
      %p219 = por %p217, %p218
      %p221 = scmp.ne.s32.totalorder %s204, %s220
      %p222 = scmp.eq.s32.totalorder %s23, 0
      %p223 = por %p221, %p222
      %p224 = scmp.le.s32.totalorder 1, %s17
      %p225 = scmp.lt.s32.totalorder %s17, 5
      %p226 = pnand %p224, %p225
      %p227 = pneg %p226
      // Predicated region
      $region9: #{_lambda_.1} parent=5 // pred_check
        _
      $region10: #{_lambda_.1} parent=5 // pred_check_branch
        %229 = sbr.rel (%p226) target = $region12
      $region11: #{_lambda_.1} parent=5 // pred_region
        %s230 = ssub.s32 %s17, 1
        // Predicated region
        $region13: #{_lambda_.1} parent=11 // pred_check
          %p231 = pneg %p104
        $region14: #{_lambda_.1} parent=11 // pred_check_branch
          %233 = sbr.rel (%p231) target = $region16
        $region15: #{_lambda_.1} parent=11 // pred_region
          %s235 = ssub.s32 1024, 1024
          %236 = vsyncadd [#allocation5], %s235
          %s237 = sshll.u32 [#allocation4], 4
          %s238 = int_to_ptr.vmem [resolvable:$true] %s237
          %243 = dma.hbm_to_vmem [thread:$0]  %s2, 1024, %s238, [#allocation5], 128, 128, 8
        $region16: #{_lambda_.1} parent=11 // pred_fallthru
          _
        // Predicated region
        $region17: #{_lambda_.1} parent=11 // pred_check
          %p244 = pneg %p125
        $region18: #{_lambda_.1} parent=11 // pred_check_branch
          %246 = sbr.rel (%p244) target = $region20
        $region19: #{_lambda_.1} parent=11 // pred_region
          %s248 = ssub.s32 3584, 3584
          %249 = vsyncadd [#allocation7], %s248
          %s250 = sshll.u32 [#allocation6], 4
          %s251 = int_to_ptr.vmem [resolvable:$true] %s250
          %256 = dma.hbm_to_vmem [thread:$0]  %s3, 3584, %s251, [#allocation7], 128, 128, 8
        $region20: #{_lambda_.1} parent=11 // pred_fallthru
          _
        // Predicated region
        $region21: #{_lambda_.1} parent=11 // pred_check
          %p257 = pneg %p146
        $region22: #{_lambda_.1} parent=11 // pred_check_branch
          %259 = sbr.rel (%p257) target = $region24
        $region23: #{_lambda_.1} parent=11 // pred_region
          _
        $region24: #{_lambda_.1} parent=11 // pred_fallthru
          _
        // Predicated region
        $region25: #{_lambda_.1} parent=11 // pred_check
          %p260 = pneg %p167
        $region26: #{_lambda_.1} parent=11 // pred_check_branch
          %262 = sbr.rel (%p260) target = $region28
        $region27: #{_lambda_.1} parent=11 // pred_region
          _
        $region28: #{_lambda_.1} parent=11 // pred_fallthru
          _
        // Predicated region
        $region29: #{_lambda_.1} parent=11 // pred_check
          %p263 = pneg %p188
        $region30: #{_lambda_.1} parent=11 // pred_check_branch
          %265 = sbr.rel (%p263) target = $region32
        $region31: #{_lambda_.1} parent=11 // pred_region
          _
        $region32: #{_lambda_.1} parent=11 // pred_fallthru
          _
      $region12: #{_lambda_.1} parent=5 // pred_fallthru
        _
      %p266 = scmp.lt.s32.totalorder %s17, 4
      // Predicated region
      $region33: #{_lambda_.1} parent=5 // pred_check
        %p267 = pneg %p266
      $region34: #{_lambda_.1} parent=5 // pred_check_branch
        %269 = sbr.rel (%p267) target = $region36
      $region35: #{_lambda_.1} parent=5 // pred_region
        // Predicated region
        $region37: #{_lambda_.1} parent=35 // pred_check
          %p270 = pneg %p51
        $region38: #{_lambda_.1} parent=35 // pred_check_branch
          %272 = sbr.rel (%p270) target = $region40
        $region39: #{_lambda_.1} parent=35 // pred_region
          %p273 = scmp.lt.s32.totalorder %s24, 1
          %s274 = scalar_select %p273, %s24, 1
          %p275 = scmp.lt.s32.totalorder %s25, 1
          %s276 = scalar_select %p275, %s25, 1
          %s277 = smul.addr %s274, 2
          %s278 = sadd.s32 %s276, %s277
          %s279 = smul.addr %s278, 4
          %s280 = scalar_lea.vmem %s0, %s279
        $region40: #{_lambda_.1} parent=35 // pred_fallthru
          _
        // Predicated region
        $region41: #{_lambda_.1} parent=35 // pred_check
          %p281 = pneg %p77
        $region42: #{_lambda_.1} parent=35 // pred_check_branch
          %283 = sbr.rel (%p281) target = $region44
        $region43: #{_lambda_.1} parent=35 // pred_region
          %p284 = scmp.lt.s32.totalorder %s24, 1
          %s285 = scalar_select %p284, %s24, 1
          %s286 = smul.addr %s285, 4
          %s287 = scalar_lea.vmem %s1, %s286
        $region44: #{_lambda_.1} parent=35 // pred_fallthru
          _
      $region36: #{_lambda_.1} parent=5 // pred_fallthru
        _
      %p288 = scmp.le.s32.totalorder 1, %s17
      %p289 = scmp.lt.s32.totalorder %s17, 5
      %p290 = pnand %p288, %p289
      %p291 = pneg %p290
      // Predicated region
      $region45: #{_lambda_.1} parent=5 // pred_check
        _
      $region46: #{_lambda_.1} parent=5 // pred_check_branch
        %293 = sbr.rel (%p290) target = $region48
      $region47: #{_lambda_.1} parent=5 // pred_region
        %s294 = ssub.s32 %s17, 1
        // Predicated region
        $region49: #{_lambda_.1} parent=47 // pred_check
          %p295 = pneg %p104
        $region50: #{_lambda_.1} parent=47 // pred_check_branch
          %297 = sbr.rel (%p295) target = $region52
        $region51: #{_lambda_.1} parent=47 // pred_region
          %298 = dma.done [#allocation5], 1024
        $region52: #{_lambda_.1} parent=47 // pred_fallthru
          _
        // Predicated region
        $region53: #{_lambda_.1} parent=47 // pred_check
          %p299 = pneg %p125
        $region54: #{_lambda_.1} parent=47 // pred_check_branch
          %301 = sbr.rel (%p299) target = $region56
        $region55: #{_lambda_.1} parent=47 // pred_region
          %302 = dma.done [#allocation7], 3584
        $region56: #{_lambda_.1} parent=47 // pred_fallthru
          _
        %p303 = scmp.lt.s32.totalorder %s26, 1
        %s304 = scalar_select %p303, %s26, 1
        %p305 = scmp.lt.s32.totalorder %s27, 1
        %s306 = scalar_select %p305, %s27, 1
        %s307 = smul.addr %s304, 2
        %s308 = sadd.s32 %s306, %s307
        %s309 = smul.addr %s308, 4
        %s310 = scalar_lea.vmem %s0, %s309
        %p311 = pneg %p57
        %p312 = pneg %p54
        %p313 = scmp.lt.s32.totalorder %s26, 1
        %s314 = scalar_select %p313, %s26, 1
        %s315 = smul.addr %s314, 4
        %s316 = scalar_lea.vmem %s1, %s315
        %p317 = pneg %p83
        %p318 = pneg %p80
        %p319 = pneg %p104
        %p320 = pneg %p101
        %p321 = pneg %p125
        %p322 = pneg %p122
        %p323 = pneg %p146
        %p324 = pneg %p143
        %p325 = pneg %p167
        %p326 = pneg %p164
        %p327 = pneg %p188
        %p328 = pneg %p185
        %p329 = pneg %p216
        %p330 = pneg %p213
        %p331 = scmp.lt.s32.totalorder %s26, 1
        %s332 = scalar_select %p331, %s26, 1
        %p333 = scmp.lt.s32.totalorder %s27, 1
        %s334 = scalar_select %p333, %s27, 1
        %s335 = smul.addr %s332, 2
        %s336 = sadd.s32 %s334, %s335
        %s337 = scalar_lea.vmem %s7, %s336
        %p338 = scmp.lt.s32.totalorder %s26, 1
        %s339 = scalar_select %p338, %s26, 1
        %p340 = scmp.lt.s32.totalorder %s27, 1
        %s341 = scalar_select %p340, %s27, 1
        %s342 = smul.addr %s339, 2
        %s343 = sadd.s32 %s341, %s342
        %s344 = smul.addr %s343, 4
        %s345 = scalar_lea.vmem %s0, %s344
        %p346 = scmp.lt.s32.totalorder %s26, 1
        %s347 = scalar_select %p346, %s26, 1
        %s348 = smul.addr %s347, 4
        %s349 = scalar_lea.vmem %s1, %s348
        %p350 = scmp.lt.s32.totalorder %s26, 1
        %s351 = scalar_select %p350, %s26, 1
        %p352 = scmp.lt.s32.totalorder %s27, 1
        %s353 = scalar_select %p352, %s27, 1
        %s354 = smul.addr %s351, 2
        %s355 = sadd.s32 %s353, %s354
        %s356 = scalar_lea.vmem %s7, %s355
        %p357 = scmp.eq.s32.totalorder %s27, 0
        // Predicated region
        $region57: #{_lambda_.1} parent=47 // pred_check
          %p358 = pneg %p357
        $region58: #{_lambda_.1} parent=47 // pred_check_branch
          %360 = sbr.rel (%p358) target = $region60
        $region59: #{_lambda_.1} parent=47 // pred_region
          %v361 = vld [vmem:[%s349] sm:$0x7]
          %v362 = vld [vmem:[#allocation4] sm:$0xff]
          %v363 = vld [vmem:[#allocation4 + $0x8] sm:$0xff]
          %v364 = vld [vmem:[#allocation4 + $0x10] sm:$0xff]
          %v365 = vld [vmem:[#allocation4 + $0x18] sm:$0xff]
          %v366 = vld [vmem:[%s5] sm:$0xff]
          %v367 = vld [vmem:[%s5 + $0x8] sm:$0xff]
          %v368 = vld [vmem:[%s5 + $0x10] sm:$0xff]
          %v369 = vld [vmem:[%s5 + $0x18] sm:$0xff]
          %371 = vset.pattern.permute.xlu0 0
          %372 = vperm.xlu0 %371, %v366
          %v373 = vpop.permute.xlu0 %372
          %376 = vset.pattern.permute.xlu0 0
          %377 = vperm.xlu0 %376, %v367
          %v378 = vpop.permute.xlu0 %377
          %381 = vset.pattern.permute.xlu0 0
          %382 = vperm.xlu0 %381, %v368
          %v383 = vpop.permute.xlu0 %382
          %386 = vset.pattern.permute.xlu0 0
          %387 = vperm.xlu0 %386, %v369
          %v388 = vpop.permute.xlu0 %387
          %vm390 = vcmask 23552
          %v392 = vsel %vm390, %v362, 0
          %v395 = vsel %vm390, %v363, 0
          %v398 = vsel %vm390, %v364, 0
          %v401 = vsel %vm390, %v365, 0
          %vm403 = vcmask 1042432
          %v405 = vsel %vm403, %v361, 0
          %407 = vmatprep.subr.mxu0 0.0
          %408 = vmatpush1.msra.mxu0 0.0
          %409 = vmatprep.subr.mxu0 0.0
          %410 = vmatpush1.msra.mxu0 0.0
          %411 = vmatprep.subr.mxu0 0.0
          %412 = vmatpush1.msra.mxu0 0.0
          %413 = vmatprep.subr.mxu0 0.0
          %414 = vmatpush1.msra.mxu0 0.0
          %415 = vmatprep.subr.mxu0 0.0
          %416 = vmatpush1.msra.mxu0 0.0
          %417 = vmatprep.subr.mxu0 0.0
          %418 = vmatpush1.msra.mxu0 0.0
          %419 = vmatprep.subr.mxu0 0.0
          %420 = vmatpush1.msra.mxu0 0.0
          %421 = vmatprep.subr.mxu0 0.0
          %422 = vmatpush1.msra.mxu0 0.0
          %423 = vmatprep.subr.mxu0 0.0
          %424 = vmatpush1.msra.mxu0 0.0
          %425 = vmatprep.subr.mxu0 0.0
          %426 = vmatpush1.msra.mxu0 0.0
          %427 = vmatprep.subr.mxu0 0.0
          %428 = vmatpush1.msra.mxu0 0.0
          %429 = vmatprep.subr.mxu0 0.0
          %430 = vmatpush1.msra.mxu0 0.0
          %431 = vmatprep.subr.mxu0 0.0
          %432 = vmatpush1.msra.mxu0 0.0
          %433 = vmatprep.subr.mxu0 0.0
          %434 = vmatpush1.msra.mxu0 0.0
          %435 = vmatprep.subr.mxu0 0.0
          %436 = vmatpush1.msra.mxu0 0.0
          %437 = vmatprep.subr.mxu0 0.0
          %438 = vmatpush1.msra.mxu0 %v405
          %439 = vmatprep.subr.mxu0 0.0
          %440 = vmatpush2.msra.mxu0 0.0
          %441 = vmatprep.subr.mxu0 0.0
          %442 = vmatpush2.msra.mxu0 0.0
          %443 = vmatprep.subr.mxu0 0.0
          %444 = vmatpush2.msra.mxu0 0.0
          %445 = vmatprep.subr.mxu0 0.0
          %446 = vmatpush2.msra.mxu0 0.0
          %447 = vmatprep.subr.mxu0 0.0
          %448 = vmatpush2.msra.mxu0 0.0
          %449 = vmatprep.subr.mxu0 0.0
          %450 = vmatpush2.msra.mxu0 0.0
          %451 = vmatprep.subr.mxu0 0.0
          %452 = vmatpush2.msra.mxu0 0.0
          %453 = vmatprep.subr.mxu0 0.0
          %454 = vmatpush2.msra.mxu0 0.0
          %455 = vmatprep.subr.mxu0 0.0
          %456 = vmatpush2.msra.mxu0 0.0
          %457 = vmatprep.subr.mxu0 0.0
          %458 = vmatpush2.msra.mxu0 0.0
          %459 = vmatprep.subr.mxu0 0.0
          %460 = vmatpush2.msra.mxu0 0.0
          %461 = vmatprep.subr.mxu0 0.0
          %462 = vmatpush2.msra.mxu0 0.0
          %463 = vmatprep.subr.mxu0 0.0
          %464 = vmatpush2.msra.mxu0 0.0
          %465 = vmatprep.subr.mxu0 0.0
          %466 = vmatpush2.msra.mxu0 0.0
          %467 = vmatprep.subr.mxu0 0.0
          %468 = vmatpush2.msra.mxu0 0.0
          %469 = vmatprep.subr.mxu0 0.0
          %470 = vmatpush2.msra.mxu0 0.0
          %471 = vmatprep.mubr.f32.mxu0 0.0
          %472 = vmatmul.mubr.f32.gmra.mxu0 %v392
          %v473 = vpop.f32.mrf.mxu0
          %v474 = vadd.f32 %v373, %v473
          %v475 = vpop.f32.mrf.mxu0
          %476 = vmatprep.mubr.f32.mxu0 0.0
          %477 = vmatmul.mubr.f32.gmra.mxu0 %v395
          %v478 = vpop.f32.mrf.mxu0
          %v479 = vadd.f32 %v378, %v478
          %v480 = vpop.f32.mrf.mxu0
          %481 = vmatprep.mubr.f32.mxu0 0.0
          %482 = vmatmul.mubr.f32.gmra.mxu0 %v398
          %v483 = vpop.f32.mrf.mxu0
          %v484 = vadd.f32 %v383, %v483
          %v485 = vpop.f32.mrf.mxu0
          %486 = vmatprep.mubr.f32.mxu0 0.0
          %487 = vmatmul.mubr.f32.gmra.mxu0 %v401
          %v488 = vpop.f32.mrf.mxu0
          %v489 = vadd.f32 %v388, %v488
          %v490 = vpop.f32.mrf.mxu0
          %491 = vdwg.mxu0
          %v492 = vmax.f32 %v474, 0.0
          %v493 = vmax.f32 %v479, 0.0
          %v494 = vmax.f32 %v484, 0.0
          %v495 = vmax.f32 %v489, 0.0
          %v496 = vld [vmem:[#allocation6] sm:$0xff]
          %v497 = vld [vmem:[#allocation6 + $0x8] sm:$0xff]
          %v498 = vld [vmem:[#allocation6 + $0x10] sm:$0xff]
          %v499 = vld [vmem:[#allocation6 + $0x18] sm:$0xff]
          %500 = vset.pattern.permute.xlu0 1
          %501 = vperm.xlu0 %500, %v366
          %v502 = vpop.permute.xlu0 %501
          %504 = vset.pattern.permute.xlu0 1
          %505 = vperm.xlu0 %504, %v367
          %v506 = vpop.permute.xlu0 %505
          %508 = vset.pattern.permute.xlu0 1
          %509 = vperm.xlu0 %508, %v368
          %v510 = vpop.permute.xlu0 %509
          %512 = vset.pattern.permute.xlu0 1
          %513 = vperm.xlu0 %512, %v369
          %v514 = vpop.permute.xlu0 %513
          %vm516 = vcmask 261120
          %v518 = vsel %vm516, %v496, 0
          %v521 = vsel %vm516, %v497, 0
          %v524 = vsel %vm516, %v498, 0
          %v527 = vsel %vm516, %v499, 0
          %529 = vmatprep.subr.mxu0 0.0
          %530 = vmatpush1.msra.mxu0 0.0
          %531 = vmatprep.subr.mxu0 0.0
          %532 = vmatpush1.msra.mxu0 0.0
          %533 = vmatprep.subr.mxu0 0.0
          %534 = vmatpush1.msra.mxu0 0.0
          %535 = vmatprep.subr.mxu0 0.0
          %536 = vmatpush1.msra.mxu0 0.0
          %537 = vmatprep.subr.mxu0 0.0
          %538 = vmatpush1.msra.mxu0 0.0
          %539 = vmatprep.subr.mxu0 0.0
          %540 = vmatpush1.msra.mxu0 0.0
          %541 = vmatprep.subr.mxu0 0.0
          %542 = vmatpush1.msra.mxu0 0.0
          %543 = vmatprep.subr.mxu0 0.0
          %544 = vmatpush1.msra.mxu0 0.0
          %545 = vmatprep.subr.mxu0 0.0
          %546 = vmatpush1.msra.mxu0 0.0
          %547 = vmatprep.subr.mxu0 0.0
          %548 = vmatpush1.msra.mxu0 0.0
          %549 = vmatprep.subr.mxu0 0.0
          %550 = vmatpush1.msra.mxu0 0.0
          %551 = vmatprep.subr.mxu0 0.0
          %552 = vmatpush1.msra.mxu0 0.0
          %553 = vmatprep.subr.mxu0 0.0
          %554 = vmatpush1.msra.mxu0 %v495
          %555 = vmatprep.subr.mxu0 0.0
          %556 = vmatpush1.msra.mxu0 %v494
          %557 = vmatprep.subr.mxu0 0.0
          %558 = vmatpush1.msra.mxu0 %v493
          %559 = vmatprep.subr.mxu0 0.0
          %560 = vmatpush1.msra.mxu0 %v492
          %561 = vmatprep.subr.mxu0 0.0
          %562 = vmatpush2.msra.mxu0 0.0
          %563 = vmatprep.subr.mxu0 0.0
          %564 = vmatpush2.msra.mxu0 0.0
          %565 = vmatprep.subr.mxu0 0.0
          %566 = vmatpush2.msra.mxu0 0.0
          %567 = vmatprep.subr.mxu0 0.0
          %568 = vmatpush2.msra.mxu0 0.0
          %569 = vmatprep.subr.mxu0 0.0
          %570 = vmatpush2.msra.mxu0 0.0
          %571 = vmatprep.subr.mxu0 0.0
          %572 = vmatpush2.msra.mxu0 0.0
          %573 = vmatprep.subr.mxu0 0.0
          %574 = vmatpush2.msra.mxu0 0.0
          %575 = vmatprep.subr.mxu0 0.0
          %576 = vmatpush2.msra.mxu0 0.0
          %577 = vmatprep.subr.mxu0 0.0
          %578 = vmatpush2.msra.mxu0 0.0
          %579 = vmatprep.subr.mxu0 0.0
          %580 = vmatpush2.msra.mxu0 0.0
          %581 = vmatprep.subr.mxu0 0.0
          %582 = vmatpush2.msra.mxu0 0.0
          %583 = vmatprep.subr.mxu0 0.0
          %584 = vmatpush2.msra.mxu0 0.0
          %585 = vmatprep.subr.mxu0 0.0
          %586 = vmatpush2.msra.mxu0 0.0
          %587 = vmatprep.subr.mxu0 0.0
          %588 = vmatpush2.msra.mxu0 0.0
          %589 = vmatprep.subr.mxu0 0.0
          %590 = vmatpush2.msra.mxu0 0.0
          %591 = vmatprep.subr.mxu0 0.0
          %592 = vmatpush2.msra.mxu0 0.0
          %593 = vmatprep.mubr.f32.mxu0 0.0
          %594 = vmatmul.mubr.f32.gmra.mxu0 %v518
          %v595 = vpop.f32.mrf.mxu0
          %v596 = vadd.f32 %v502, %v595
          %v597 = vpop.f32.mrf.mxu0
          %598 = vmatprep.mubr.f32.mxu0 0.0
          %599 = vmatmul.mubr.f32.gmra.mxu0 %v521
          %v600 = vpop.f32.mrf.mxu0
          %v601 = vadd.f32 %v506, %v600
          %v602 = vpop.f32.mrf.mxu0
          %603 = vmatprep.mubr.f32.mxu0 0.0
          %604 = vmatmul.mubr.f32.gmra.mxu0 %v524
          %v605 = vpop.f32.mrf.mxu0
          %v606 = vadd.f32 %v510, %v605
          %v607 = vpop.f32.mrf.mxu0
          %608 = vmatprep.mubr.f32.mxu0 0.0
          %609 = vmatmul.mubr.f32.gmra.mxu0 %v527
          %v610 = vpop.f32.mrf.mxu0
          %v611 = vadd.f32 %v514, %v610
          %v612 = vpop.f32.mrf.mxu0
          %613 = vdwg.mxu0
          %614 = vmax.xlane.f32.xlu0 %v596
          %v615 = vpop.xlane.xlu0 %614
          %616 = vmax.xlane.f32.xlu0 %v601
          %v617 = vpop.xlane.xlu0 %616
          %618 = vmax.xlane.f32.xlu0 %v606
          %v619 = vpop.xlane.xlu0 %618
          %620 = vmax.xlane.f32.xlu0 %v611
          %v621 = vpop.xlane.xlu0 %620
          %s622 = scalar_lea.vmem [#allocation6], 32
          %v623 = vld [vmem:[%s622] sm:$0xff]
          %v624 = vld [vmem:[%s622 + $0x8] sm:$0xff]
          %v625 = vld [vmem:[%s622 + $0x10] sm:$0xff]
          %v626 = vld [vmem:[%s622 + $0x18] sm:$0xff]
          %627 = vrot.lane.b32.xlu0 %v366, 125
          %v628 = vpop.permute.xlu0 %627
          %629 = vrot.lane.b32.xlu0 %v367, 125
          %v630 = vpop.permute.xlu0 %629
          %631 = vrot.lane.b32.xlu0 %v368, 125
          %v632 = vpop.permute.xlu0 %631
          %633 = vrot.lane.b32.xlu0 %v369, 125
          %v634 = vpop.permute.xlu0 %633
          %v640 = vsel %vm516, %v623, 0
          %v643 = vsel %vm516, %v624, 0
          %v646 = vsel %vm516, %v625, 0
          %v649 = vsel %vm516, %v626, 0
          %651 = vmatprep.subr.mxu0 0.0
          %652 = vmatpush1.msra.mxu0 0.0
          %653 = vmatprep.subr.mxu0 0.0
          %654 = vmatpush1.msra.mxu0 0.0
          %655 = vmatprep.subr.mxu0 0.0
          %656 = vmatpush1.msra.mxu0 0.0
          %657 = vmatprep.subr.mxu0 0.0
          %658 = vmatpush1.msra.mxu0 0.0
          %659 = vmatprep.subr.mxu0 0.0
          %660 = vmatpush1.msra.mxu0 0.0
          %661 = vmatprep.subr.mxu0 0.0
          %662 = vmatpush1.msra.mxu0 0.0
          %663 = vmatprep.subr.mxu0 0.0
          %664 = vmatpush1.msra.mxu0 0.0
          %665 = vmatprep.subr.mxu0 0.0
          %666 = vmatpush1.msra.mxu0 0.0
          %667 = vmatprep.subr.mxu0 0.0
          %668 = vmatpush1.msra.mxu0 0.0
          %669 = vmatprep.subr.mxu0 0.0
          %670 = vmatpush1.msra.mxu0 0.0
          %671 = vmatprep.subr.mxu0 0.0
          %672 = vmatpush1.msra.mxu0 0.0
          %673 = vmatprep.subr.mxu0 0.0
          %674 = vmatpush1.msra.mxu0 0.0
          %675 = vmatprep.subr.mxu0 0.0
          %676 = vmatpush1.msra.mxu0 %v621
          %677 = vmatprep.subr.mxu0 0.0
          %678 = vmatpush1.msra.mxu0 %v619
          %679 = vmatprep.subr.mxu0 0.0
          %680 = vmatpush1.msra.mxu0 %v617
          %681 = vmatprep.subr.mxu0 0.0
          %682 = vmatpush1.msra.mxu0 %v615
          %683 = vmatprep.subr.mxu0 0.0
          %684 = vmatpush2.msra.mxu0 0.0
          %685 = vmatprep.subr.mxu0 0.0
          %686 = vmatpush2.msra.mxu0 0.0
          %687 = vmatprep.subr.mxu0 0.0
          %688 = vmatpush2.msra.mxu0 0.0
          %689 = vmatprep.subr.mxu0 0.0
          %690 = vmatpush2.msra.mxu0 0.0
          %691 = vmatprep.subr.mxu0 0.0
          %692 = vmatpush2.msra.mxu0 0.0
          %693 = vmatprep.subr.mxu0 0.0
          %694 = vmatpush2.msra.mxu0 0.0
          %695 = vmatprep.subr.mxu0 0.0
          %696 = vmatpush2.msra.mxu0 0.0
          %697 = vmatprep.subr.mxu0 0.0
          %698 = vmatpush2.msra.mxu0 0.0
          %699 = vmatprep.subr.mxu0 0.0
          %700 = vmatpush2.msra.mxu0 0.0
          %701 = vmatprep.subr.mxu0 0.0
          %702 = vmatpush2.msra.mxu0 0.0
          %703 = vmatprep.subr.mxu0 0.0
          %704 = vmatpush2.msra.mxu0 0.0
          %705 = vmatprep.subr.mxu0 0.0
          %706 = vmatpush2.msra.mxu0 0.0
          %707 = vmatprep.subr.mxu0 0.0
          %708 = vmatpush2.msra.mxu0 0.0
          %709 = vmatprep.subr.mxu0 0.0
          %710 = vmatpush2.msra.mxu0 0.0
          %711 = vmatprep.subr.mxu0 0.0
          %712 = vmatpush2.msra.mxu0 0.0
          %713 = vmatprep.subr.mxu0 0.0
          %714 = vmatpush2.msra.mxu0 0.0
          %715 = vmatprep.mubr.f32.mxu0 0.0
          %716 = vmatmul.mubr.f32.gmra.mxu0 %v640
          %v717 = vpop.f32.mrf.mxu0
          %v718 = vadd.f32 %v628, %v717
          %v719 = vpop.f32.mrf.mxu0
          %720 = vmatprep.mubr.f32.mxu0 0.0
          %721 = vmatmul.mubr.f32.gmra.mxu0 %v643
          %v722 = vpop.f32.mrf.mxu0
          %v723 = vadd.f32 %v630, %v722
          %v724 = vpop.f32.mrf.mxu0
          %725 = vmatprep.mubr.f32.mxu0 0.0
          %726 = vmatmul.mubr.f32.gmra.mxu0 %v646
          %v727 = vpop.f32.mrf.mxu0
          %v728 = vadd.f32 %v632, %v727
          %v729 = vpop.f32.mrf.mxu0
          %730 = vmatprep.mubr.f32.mxu0 0.0
          %731 = vmatmul.mubr.f32.gmra.mxu0 %v649
          %v732 = vpop.f32.mrf.mxu0
          %v733 = vadd.f32 %v634, %v732
          %v734 = vpop.f32.mrf.mxu0
          %735 = vdwg.mxu0
          %vm736 = vcmask 7168
          %737 = vst.msk [vmem:[#allocation2] sm:$0xff] %vm736, %v718
          %738 = vst.msk [vmem:[#allocation2 + $0x8] sm:$0xff] %vm736, %v723
          %739 = vst.msk [vmem:[#allocation2 + $0x10] sm:$0xff] %vm736, %v728
          %740 = vst.msk [vmem:[#allocation2 + $0x18] sm:$0xff] %vm736, %v733
          %s741 = scalar_lea.vmem [#allocation6], 128
          %v742 = vld [vmem:[%s741] sm:$0xff]
          %v743 = vld [vmem:[%s741 + $0x8] sm:$0xff]
          %v744 = vld [vmem:[%s741 + $0x10] sm:$0xff]
          %v745 = vld [vmem:[%s741 + $0x18] sm:$0xff]
          %v746 = vld [vmem:[%s5] sm:$0xff]
          %v747 = vld [vmem:[%s5 + $0x8] sm:$0xff]
          %v748 = vld [vmem:[%s5 + $0x10] sm:$0xff]
          %v749 = vld [vmem:[%s5 + $0x18] sm:$0xff]
          %754 = vrot.lane.b32.xlu0 %v746, 122
          %v755 = vpop.permute.xlu0 %754
          %756 = vrot.lane.b32.xlu0 %v747, 122
          %v757 = vpop.permute.xlu0 %756
          %758 = vrot.lane.b32.xlu0 %v748, 122
          %v759 = vpop.permute.xlu0 %758
          %760 = vrot.lane.b32.xlu0 %v749, 122
          %v761 = vpop.permute.xlu0 %760
          %v767 = vsel %vm516, %v742, 0
          %v770 = vsel %vm516, %v743, 0
          %v773 = vsel %vm516, %v744, 0
          %v776 = vsel %vm516, %v745, 0
          %778 = vmatprep.subr.mxu0 0.0
          %779 = vmatpush1.msra.mxu0 0.0
          %780 = vmatprep.subr.mxu0 0.0
          %781 = vmatpush1.msra.mxu0 0.0
          %782 = vmatprep.subr.mxu0 0.0
          %783 = vmatpush1.msra.mxu0 0.0
          %784 = vmatprep.subr.mxu0 0.0
          %785 = vmatpush1.msra.mxu0 0.0
          %786 = vmatprep.subr.mxu0 0.0
          %787 = vmatpush1.msra.mxu0 0.0
          %788 = vmatprep.subr.mxu0 0.0
          %789 = vmatpush1.msra.mxu0 0.0
          %790 = vmatprep.subr.mxu0 0.0
          %791 = vmatpush1.msra.mxu0 0.0
          %792 = vmatprep.subr.mxu0 0.0
          %793 = vmatpush1.msra.mxu0 0.0
          %794 = vmatprep.subr.mxu0 0.0
          %795 = vmatpush1.msra.mxu0 0.0
          %796 = vmatprep.subr.mxu0 0.0
          %797 = vmatpush1.msra.mxu0 0.0
          %798 = vmatprep.subr.mxu0 0.0
          %799 = vmatpush1.msra.mxu0 0.0
          %800 = vmatprep.subr.mxu0 0.0
          %801 = vmatpush1.msra.mxu0 0.0
          %802 = vmatprep.subr.mxu0 0.0
          %803 = vmatpush1.msra.mxu0 %v621
          %804 = vmatprep.subr.mxu0 0.0
          %805 = vmatpush1.msra.mxu0 %v619
          %806 = vmatprep.subr.mxu0 0.0
          %807 = vmatpush1.msra.mxu0 %v617
          %808 = vmatprep.subr.mxu0 0.0
          %809 = vmatpush1.msra.mxu0 %v615
          %810 = vmatprep.subr.mxu0 0.0
          %811 = vmatpush2.msra.mxu0 0.0
          %812 = vmatprep.subr.mxu0 0.0
          %813 = vmatpush2.msra.mxu0 0.0
          %814 = vmatprep.subr.mxu0 0.0
          %815 = vmatpush2.msra.mxu0 0.0
          %816 = vmatprep.subr.mxu0 0.0
          %817 = vmatpush2.msra.mxu0 0.0
          %818 = vmatprep.subr.mxu0 0.0
          %819 = vmatpush2.msra.mxu0 0.0
          %820 = vmatprep.subr.mxu0 0.0
          %821 = vmatpush2.msra.mxu0 0.0
          %822 = vmatprep.subr.mxu0 0.0
          %823 = vmatpush2.msra.mxu0 0.0
          %824 = vmatprep.subr.mxu0 0.0
          %825 = vmatpush2.msra.mxu0 0.0
          %826 = vmatprep.subr.mxu0 0.0
          %827 = vmatpush2.msra.mxu0 0.0
          %828 = vmatprep.subr.mxu0 0.0
          %829 = vmatpush2.msra.mxu0 0.0
          %830 = vmatprep.subr.mxu0 0.0
          %831 = vmatpush2.msra.mxu0 0.0
          %832 = vmatprep.subr.mxu0 0.0
          %833 = vmatpush2.msra.mxu0 0.0
          %834 = vmatprep.subr.mxu0 0.0
          %835 = vmatpush2.msra.mxu0 0.0
          %836 = vmatprep.subr.mxu0 0.0
          %837 = vmatpush2.msra.mxu0 0.0
          %838 = vmatprep.subr.mxu0 0.0
          %839 = vmatpush2.msra.mxu0 0.0
          %840 = vmatprep.subr.mxu0 0.0
          %841 = vmatpush2.msra.mxu0 0.0
          %842 = vmatprep.mubr.f32.mxu0 0.0
          %843 = vmatmul.mubr.f32.gmra.mxu0 %v767
          %v844 = vpop.f32.mrf.mxu0
          %v845 = vadd.f32 %v755, %v844
          %v846 = vpop.f32.mrf.mxu0
          %847 = vmatprep.mubr.f32.mxu0 0.0
          %848 = vmatmul.mubr.f32.gmra.mxu0 %v770
          %v849 = vpop.f32.mrf.mxu0
          %v850 = vadd.f32 %v757, %v849
          %v851 = vpop.f32.mrf.mxu0
          %852 = vmatprep.mubr.f32.mxu0 0.0
          %853 = vmatmul.mubr.f32.gmra.mxu0 %v773
          %v854 = vpop.f32.mrf.mxu0
          %v855 = vadd.f32 %v759, %v854
          %v856 = vpop.f32.mrf.mxu0
          %857 = vmatprep.mubr.f32.mxu0 0.0
          %858 = vmatmul.mubr.f32.gmra.mxu0 %v776
          %v859 = vpop.f32.mrf.mxu0
          %v860 = vadd.f32 %v761, %v859
          %v861 = vpop.f32.mrf.mxu0
          %862 = vdwg.mxu0
          %s863 = scalar_lea.vmem [#allocation2], 32
          %864 = vst.msk [vmem:[%s863] sm:$0xff] %vm736, %v845
          %865 = vst.msk [vmem:[%s863 + $0x8] sm:$0xff] %vm736, %v850
          %866 = vst.msk [vmem:[%s863 + $0x10] sm:$0xff] %vm736, %v855
          %867 = vst.msk [vmem:[%s863 + $0x18] sm:$0xff] %vm736, %v860
        $region60: #{_lambda_.1} parent=47 // pred_fallthru
          _
        %v868 = vld [vmem:[%s345] sm:$0x7]
        %s869 = scalar_lea.vmem [#allocation4], 32
        %v870 = vld [vmem:[%s869] sm:$0xff]
        %v871 = vld [vmem:[%s869 + $0x8] sm:$0xff]
        %v872 = vld [vmem:[%s869 + $0x10] sm:$0xff]
        %v873 = vld [vmem:[%s869 + $0x18] sm:$0xff]
        %v874 = vld [vmem:[%s5] sm:$0xff]
        %v875 = vld [vmem:[%s5 + $0x8] sm:$0xff]
        %v876 = vld [vmem:[%s5 + $0x10] sm:$0xff]
        %v877 = vld [vmem:[%s5 + $0x18] sm:$0xff]
        %879 = vset.pattern.permute.xlu0 2
        %880 = vperm.xlu0 %879, %v874
        %v881 = vpop.permute.xlu0 %880
        %884 = vset.pattern.permute.xlu0 2
        %885 = vperm.xlu0 %884, %v875
        %v886 = vpop.permute.xlu0 %885
        %889 = vset.pattern.permute.xlu0 2
        %890 = vperm.xlu0 %889, %v876
        %v891 = vpop.permute.xlu0 %890
        %894 = vset.pattern.permute.xlu0 2
        %895 = vperm.xlu0 %894, %v877
        %v896 = vpop.permute.xlu0 %895
        %vm898 = vcmask 23552
        %v900 = vsel %vm898, %v870, 0
        %v903 = vsel %vm898, %v871, 0
        %v906 = vsel %vm898, %v872, 0
        %v909 = vsel %vm898, %v873, 0
        %vm911 = vcmask 1042432
        %v913 = vsel %vm911, %v868, 0
        %915 = vmatprep.subr.mxu0 0.0
        %916 = vmatpush1.msra.mxu0 0.0
        %917 = vmatprep.subr.mxu0 0.0
        %918 = vmatpush1.msra.mxu0 0.0
        %919 = vmatprep.subr.mxu0 0.0
        %920 = vmatpush1.msra.mxu0 0.0
        %921 = vmatprep.subr.mxu0 0.0
        %922 = vmatpush1.msra.mxu0 0.0
        %923 = vmatprep.subr.mxu0 0.0
        %924 = vmatpush1.msra.mxu0 0.0
        %925 = vmatprep.subr.mxu0 0.0
        %926 = vmatpush1.msra.mxu0 0.0
        %927 = vmatprep.subr.mxu0 0.0
        %928 = vmatpush1.msra.mxu0 0.0
        %929 = vmatprep.subr.mxu0 0.0
        %930 = vmatpush1.msra.mxu0 0.0
        %931 = vmatprep.subr.mxu0 0.0
        %932 = vmatpush1.msra.mxu0 0.0
        %933 = vmatprep.subr.mxu0 0.0
        %934 = vmatpush1.msra.mxu0 0.0
        %935 = vmatprep.subr.mxu0 0.0
        %936 = vmatpush1.msra.mxu0 0.0
        %937 = vmatprep.subr.mxu0 0.0
        %938 = vmatpush1.msra.mxu0 0.0
        %939 = vmatprep.subr.mxu0 0.0
        %940 = vmatpush1.msra.mxu0 0.0
        %941 = vmatprep.subr.mxu0 0.0
        %942 = vmatpush1.msra.mxu0 0.0
        %943 = vmatprep.subr.mxu0 0.0
        %944 = vmatpush1.msra.mxu0 0.0
        %945 = vmatprep.subr.mxu0 0.0
        %946 = vmatpush1.msra.mxu0 %v913
        %947 = vmatprep.subr.mxu0 0.0
        %948 = vmatpush2.msra.mxu0 0.0
        %949 = vmatprep.subr.mxu0 0.0
        %950 = vmatpush2.msra.mxu0 0.0
        %951 = vmatprep.subr.mxu0 0.0
        %952 = vmatpush2.msra.mxu0 0.0
        %953 = vmatprep.subr.mxu0 0.0
        %954 = vmatpush2.msra.mxu0 0.0
        %955 = vmatprep.subr.mxu0 0.0
        %956 = vmatpush2.msra.mxu0 0.0
        %957 = vmatprep.subr.mxu0 0.0
        %958 = vmatpush2.msra.mxu0 0.0
        %959 = vmatprep.subr.mxu0 0.0
        %960 = vmatpush2.msra.mxu0 0.0
        %961 = vmatprep.subr.mxu0 0.0
        %962 = vmatpush2.msra.mxu0 0.0
        %963 = vmatprep.subr.mxu0 0.0
        %964 = vmatpush2.msra.mxu0 0.0
        %965 = vmatprep.subr.mxu0 0.0
        %966 = vmatpush2.msra.mxu0 0.0
        %967 = vmatprep.subr.mxu0 0.0
        %968 = vmatpush2.msra.mxu0 0.0
        %969 = vmatprep.subr.mxu0 0.0
        %970 = vmatpush2.msra.mxu0 0.0
        %971 = vmatprep.subr.mxu0 0.0
        %972 = vmatpush2.msra.mxu0 0.0
        %973 = vmatprep.subr.mxu0 0.0
        %974 = vmatpush2.msra.mxu0 0.0
        %975 = vmatprep.subr.mxu0 0.0
        %976 = vmatpush2.msra.mxu0 0.0
        %977 = vmatprep.subr.mxu0 0.0
        %978 = vmatpush2.msra.mxu0 0.0
        %979 = vmatprep.mubr.f32.mxu0 0.0
        %980 = vmatmul.mubr.f32.gmra.mxu0 %v900
        %v981 = vpop.f32.mrf.mxu0
        %v982 = vadd.f32 %v881, %v981
        %v983 = vpop.f32.mrf.mxu0
        %984 = vmatprep.mubr.f32.mxu0 0.0
        %985 = vmatmul.mubr.f32.gmra.mxu0 %v903
        %v986 = vpop.f32.mrf.mxu0
        %v987 = vadd.f32 %v886, %v986
        %v988 = vpop.f32.mrf.mxu0
        %989 = vmatprep.mubr.f32.mxu0 0.0
        %990 = vmatmul.mubr.f32.gmra.mxu0 %v906
        %v991 = vpop.f32.mrf.mxu0
        %v992 = vadd.f32 %v891, %v991
        %v993 = vpop.f32.mrf.mxu0
        %994 = vmatprep.mubr.f32.mxu0 0.0
        %995 = vmatmul.mubr.f32.gmra.mxu0 %v909
        %v996 = vpop.f32.mrf.mxu0
        %v997 = vadd.f32 %v896, %v996
        %v998 = vpop.f32.mrf.mxu0
        %999 = vdwg.mxu0
        %v1000 = vld [vmem:[#allocation2] sm:$0xff]
        %v1001 = vld [vmem:[#allocation2 + $0x8] sm:$0xff]
        %v1002 = vld [vmem:[#allocation2 + $0x10] sm:$0xff]
        %v1003 = vld [vmem:[#allocation2 + $0x18] sm:$0xff]
        %s1004 = scalar_lea.vmem [#allocation6], 64
        %v1005 = vld [vmem:[%s1004] sm:$0xff]
        %v1006 = vld [vmem:[%s1004 + $0x8] sm:$0xff]
        %v1007 = vld [vmem:[%s1004 + $0x10] sm:$0xff]
        %v1008 = vld [vmem:[%s1004 + $0x18] sm:$0xff]
        %s1009 = scalar_lea.vmem [#allocation6], 96
        %v1010 = vld [vmem:[%s1009] sm:$0xff]
        %v1011 = vld [vmem:[%s1009 + $0x8] sm:$0xff]
        %v1012 = vld [vmem:[%s1009 + $0x10] sm:$0xff]
        %v1013 = vld [vmem:[%s1009 + $0x18] sm:$0xff]
        %1015 = vset.pattern.permute.xlu0 0
        %1016 = vperm.xlu0 %1015, %v1000
        %v1017 = vpop.permute.xlu0 %1016
        %1020 = vset.pattern.permute.xlu0 0
        %1021 = vperm.xlu0 %1020, %v1001
        %v1022 = vpop.permute.xlu0 %1021
        %1025 = vset.pattern.permute.xlu0 0
        %1026 = vperm.xlu0 %1025, %v1002
        %v1027 = vpop.permute.xlu0 %1026
        %1030 = vset.pattern.permute.xlu0 0
        %1031 = vperm.xlu0 %1030, %v1003
        %v1032 = vpop.permute.xlu0 %1031
        %v1034 = vadd.f32 %v982, %v1017
        %v1035 = vadd.f32 %v987, %v1022
        %v1036 = vadd.f32 %v992, %v1027
        %v1037 = vadd.f32 %v997, %v1032
        %v1038 = vmax.f32 %v1034, 0.0
        %v1039 = vmax.f32 %v1035, 0.0
        %v1040 = vmax.f32 %v1036, 0.0
        %v1041 = vmax.f32 %v1037, 0.0
        %1042 = vset.pattern.permute.xlu0 4
        %1043 = vperm.xlu0 %1042, %v874
        %v1044 = vpop.permute.xlu0 %1043
        %1046 = vset.pattern.permute.xlu0 4
        %1047 = vperm.xlu0 %1046, %v875
        %v1048 = vpop.permute.xlu0 %1047
        %1050 = vset.pattern.permute.xlu0 4
        %1051 = vperm.xlu0 %1050, %v876
        %v1052 = vpop.permute.xlu0 %1051
        %1054 = vset.pattern.permute.xlu0 4
        %1055 = vperm.xlu0 %1054, %v877
        %v1056 = vpop.permute.xlu0 %1055
        %vm1058 = vcmask 261120
        %v1060 = vsel %vm1058, %v1005, 0
        %v1063 = vsel %vm1058, %v1006, 0
        %v1066 = vsel %vm1058, %v1007, 0
        %v1069 = vsel %vm1058, %v1008, 0
        %1071 = vmatprep.subr.mxu0 0.0
        %1072 = vmatpush1.msra.mxu0 0.0
        %1073 = vmatprep.subr.mxu0 0.0
        %1074 = vmatpush1.msra.mxu0 0.0
        %1075 = vmatprep.subr.mxu0 0.0
        %1076 = vmatpush1.msra.mxu0 0.0
        %1077 = vmatprep.subr.mxu0 0.0
        %1078 = vmatpush1.msra.mxu0 0.0
        %1079 = vmatprep.subr.mxu0 0.0
        %1080 = vmatpush1.msra.mxu0 0.0
        %1081 = vmatprep.subr.mxu0 0.0
        %1082 = vmatpush1.msra.mxu0 0.0
        %1083 = vmatprep.subr.mxu0 0.0
        %1084 = vmatpush1.msra.mxu0 0.0
        %1085 = vmatprep.subr.mxu0 0.0
        %1086 = vmatpush1.msra.mxu0 0.0
        %1087 = vmatprep.subr.mxu0 0.0
        %1088 = vmatpush1.msra.mxu0 0.0
        %1089 = vmatprep.subr.mxu0 0.0
        %1090 = vmatpush1.msra.mxu0 0.0
        %1091 = vmatprep.subr.mxu0 0.0
        %1092 = vmatpush1.msra.mxu0 0.0
        %1093 = vmatprep.subr.mxu0 0.0
        %1094 = vmatpush1.msra.mxu0 0.0
        %1095 = vmatprep.subr.mxu0 0.0
        %1096 = vmatpush1.msra.mxu0 %v1041
        %1097 = vmatprep.subr.mxu0 0.0
        %1098 = vmatpush1.msra.mxu0 %v1040
        %1099 = vmatprep.subr.mxu0 0.0
        %1100 = vmatpush1.msra.mxu0 %v1039
        %1101 = vmatprep.subr.mxu0 0.0
        %1102 = vmatpush1.msra.mxu0 %v1038
        %1103 = vmatprep.subr.mxu0 0.0
        %1104 = vmatpush2.msra.mxu0 0.0
        %1105 = vmatprep.subr.mxu0 0.0
        %1106 = vmatpush2.msra.mxu0 0.0
        %1107 = vmatprep.subr.mxu0 0.0
        %1108 = vmatpush2.msra.mxu0 0.0
        %1109 = vmatprep.subr.mxu0 0.0
        %1110 = vmatpush2.msra.mxu0 0.0
        %1111 = vmatprep.subr.mxu0 0.0
        %1112 = vmatpush2.msra.mxu0 0.0
        %1113 = vmatprep.subr.mxu0 0.0
        %1114 = vmatpush2.msra.mxu0 0.0
        %1115 = vmatprep.subr.mxu0 0.0
        %1116 = vmatpush2.msra.mxu0 0.0
        %1117 = vmatprep.subr.mxu0 0.0
        %1118 = vmatpush2.msra.mxu0 0.0
        %1119 = vmatprep.subr.mxu0 0.0
        %1120 = vmatpush2.msra.mxu0 0.0
        %1121 = vmatprep.subr.mxu0 0.0
        %1122 = vmatpush2.msra.mxu0 0.0
        %1123 = vmatprep.subr.mxu0 0.0
        %1124 = vmatpush2.msra.mxu0 0.0
        %1125 = vmatprep.subr.mxu0 0.0
        %1126 = vmatpush2.msra.mxu0 0.0
        %1127 = vmatprep.subr.mxu0 0.0
        %1128 = vmatpush2.msra.mxu0 0.0
        %1129 = vmatprep.subr.mxu0 0.0
        %1130 = vmatpush2.msra.mxu0 0.0
        %1131 = vmatprep.subr.mxu0 0.0
        %1132 = vmatpush2.msra.mxu0 0.0
        %1133 = vmatprep.subr.mxu0 0.0
        %1134 = vmatpush2.msra.mxu0 0.0
        %1135 = vmatprep.mubr.f32.mxu0 0.0
        %1136 = vmatmul.mubr.f32.gmra.mxu0 %v1060
        %v1137 = vpop.f32.mrf.mxu0
        %v1138 = vadd.f32 %v1044, %v1137
        %v1139 = vpop.f32.mrf.mxu0
        %1140 = vmatprep.mubr.f32.mxu0 0.0
        %1141 = vmatmul.mubr.f32.gmra.mxu0 %v1063
        %v1142 = vpop.f32.mrf.mxu0
        %v1143 = vadd.f32 %v1048, %v1142
        %v1144 = vpop.f32.mrf.mxu0
        %1145 = vmatprep.mubr.f32.mxu0 0.0
        %1146 = vmatmul.mubr.f32.gmra.mxu0 %v1066
        %v1147 = vpop.f32.mrf.mxu0
        %v1148 = vadd.f32 %v1052, %v1147
        %v1149 = vpop.f32.mrf.mxu0
        %1150 = vmatprep.mubr.f32.mxu0 0.0
        %1151 = vmatmul.mubr.f32.gmra.mxu0 %v1069
        %v1152 = vpop.f32.mrf.mxu0
        %v1153 = vadd.f32 %v1056, %v1152
        %v1154 = vpop.f32.mrf.mxu0
        %1155 = vdwg.mxu0
        %v1156 = vmax.f32 %v1138, 0.0
        %v1157 = vmax.f32 %v1143, 0.0
        %v1158 = vmax.f32 %v1148, 0.0
        %v1159 = vmax.f32 %v1153, 0.0
        %1160 = vset.pattern.permute.xlu0 5
        %1161 = vperm.xlu0 %1160, %v874
        %v1162 = vpop.permute.xlu0 %1161
        %1164 = vset.pattern.permute.xlu0 5
        %1165 = vperm.xlu0 %1164, %v875
        %v1166 = vpop.permute.xlu0 %1165
        %1168 = vset.pattern.permute.xlu0 5
        %1169 = vperm.xlu0 %1168, %v876
        %v1170 = vpop.permute.xlu0 %1169
        %1172 = vset.pattern.permute.xlu0 5
        %1173 = vperm.xlu0 %1172, %v877
        %v1174 = vpop.permute.xlu0 %1173
        %v1177 = vsel %vm1058, %v1010, 0
        %v1180 = vsel %vm1058, %v1011, 0
        %v1183 = vsel %vm1058, %v1012, 0
        %v1186 = vsel %vm1058, %v1013, 0
        %1188 = vmatprep.subr.mxu0 0.0
        %1189 = vmatpush1.msra.mxu0 0.0
        %1190 = vmatprep.subr.mxu0 0.0
        %1191 = vmatpush1.msra.mxu0 0.0
        %1192 = vmatprep.subr.mxu0 0.0
        %1193 = vmatpush1.msra.mxu0 0.0
        %1194 = vmatprep.subr.mxu0 0.0
        %1195 = vmatpush1.msra.mxu0 0.0
        %1196 = vmatprep.subr.mxu0 0.0
        %1197 = vmatpush1.msra.mxu0 0.0
        %1198 = vmatprep.subr.mxu0 0.0
        %1199 = vmatpush1.msra.mxu0 0.0
        %1200 = vmatprep.subr.mxu0 0.0
        %1201 = vmatpush1.msra.mxu0 0.0
        %1202 = vmatprep.subr.mxu0 0.0
        %1203 = vmatpush1.msra.mxu0 0.0
        %1204 = vmatprep.subr.mxu0 0.0
        %1205 = vmatpush1.msra.mxu0 0.0
        %1206 = vmatprep.subr.mxu0 0.0
        %1207 = vmatpush1.msra.mxu0 0.0
        %1208 = vmatprep.subr.mxu0 0.0
        %1209 = vmatpush1.msra.mxu0 0.0
        %1210 = vmatprep.subr.mxu0 0.0
        %1211 = vmatpush1.msra.mxu0 0.0
        %1212 = vmatprep.subr.mxu0 0.0
        %1213 = vmatpush1.msra.mxu0 %v1159
        %1214 = vmatprep.subr.mxu0 0.0
        %1215 = vmatpush1.msra.mxu0 %v1158
        %1216 = vmatprep.subr.mxu0 0.0
        %1217 = vmatpush1.msra.mxu0 %v1157
        %1218 = vmatprep.subr.mxu0 0.0
        %1219 = vmatpush1.msra.mxu0 %v1156
        %1220 = vmatprep.subr.mxu0 0.0
        %1221 = vmatpush2.msra.mxu0 0.0
        %1222 = vmatprep.subr.mxu0 0.0
        %1223 = vmatpush2.msra.mxu0 0.0
        %1224 = vmatprep.subr.mxu0 0.0
        %1225 = vmatpush2.msra.mxu0 0.0
        %1226 = vmatprep.subr.mxu0 0.0
        %1227 = vmatpush2.msra.mxu0 0.0
        %1228 = vmatprep.subr.mxu0 0.0
        %1229 = vmatpush2.msra.mxu0 0.0
        %1230 = vmatprep.subr.mxu0 0.0
        %1231 = vmatpush2.msra.mxu0 0.0
        %1232 = vmatprep.subr.mxu0 0.0
        %1233 = vmatpush2.msra.mxu0 0.0
        %1234 = vmatprep.subr.mxu0 0.0
        %1235 = vmatpush2.msra.mxu0 0.0
        %1236 = vmatprep.subr.mxu0 0.0
        %1237 = vmatpush2.msra.mxu0 0.0
        %1238 = vmatprep.subr.mxu0 0.0
        %1239 = vmatpush2.msra.mxu0 0.0
        %1240 = vmatprep.subr.mxu0 0.0
        %1241 = vmatpush2.msra.mxu0 0.0
        %1242 = vmatprep.subr.mxu0 0.0
        %1243 = vmatpush2.msra.mxu0 0.0
        %1244 = vmatprep.subr.mxu0 0.0
        %1245 = vmatpush2.msra.mxu0 0.0
        %1246 = vmatprep.subr.mxu0 0.0
        %1247 = vmatpush2.msra.mxu0 0.0
        %1248 = vmatprep.subr.mxu0 0.0
        %1249 = vmatpush2.msra.mxu0 0.0
        %1250 = vmatprep.subr.mxu0 0.0
        %1251 = vmatpush2.msra.mxu0 0.0
        %1252 = vmatprep.mubr.f32.mxu0 0.0
        %1253 = vmatmul.mubr.f32.gmra.mxu0 %v1177
        %v1254 = vpop.f32.mrf.mxu0
        %v1255 = vadd.f32 %v1162, %v1254
        %v1256 = vpop.f32.mrf.mxu0
        %1257 = vmatprep.mubr.f32.mxu0 0.0
        %1258 = vmatmul.mubr.f32.gmra.mxu0 %v1180
        %v1259 = vpop.f32.mrf.mxu0
        %v1260 = vadd.f32 %v1166, %v1259
        %v1261 = vpop.f32.mrf.mxu0
        %1262 = vmatprep.mubr.f32.mxu0 0.0
        %1263 = vmatmul.mubr.f32.gmra.mxu0 %v1183
        %v1264 = vpop.f32.mrf.mxu0
        %v1265 = vadd.f32 %v1170, %v1264
        %v1266 = vpop.f32.mrf.mxu0
        %1267 = vmatprep.mubr.f32.mxu0 0.0
        %1268 = vmatmul.mubr.f32.gmra.mxu0 %v1186
        %v1269 = vpop.f32.mrf.mxu0
        %v1270 = vadd.f32 %v1174, %v1269
        %v1271 = vpop.f32.mrf.mxu0
        %1272 = vdwg.mxu0
        %v1273 = vadd.f32 %v1034, %v1255
        %v1274 = vadd.f32 %v1035, %v1260
        %v1275 = vadd.f32 %v1036, %v1265
        %v1276 = vadd.f32 %v1037, %v1270
        %s1277 = scalar_lea.vmem [#allocation2], 32
        %v1278 = vld [vmem:[%s1277] sm:$0xff]
        %v1279 = vld [vmem:[%s1277 + $0x8] sm:$0xff]
        %v1280 = vld [vmem:[%s1277 + $0x10] sm:$0xff]
        %v1281 = vld [vmem:[%s1277 + $0x18] sm:$0xff]
        %s1282 = scalar_lea.vmem [#allocation6], 160
        %v1283 = vld [vmem:[%s1282] sm:$0xff]
        %v1284 = vld [vmem:[%s1282 + $0x8] sm:$0xff]
        %v1285 = vld [vmem:[%s1282 + $0x10] sm:$0xff]
        %v1286 = vld [vmem:[%s1282 + $0x18] sm:$0xff]
        %s1287 = scalar_lea.vmem [#allocation6], 192
        %v1288 = vld [vmem:[%s1287] sm:$0xff]
        %v1289 = vld [vmem:[%s1287 + $0x8] sm:$0xff]
        %v1290 = vld [vmem:[%s1287 + $0x10] sm:$0xff]
        %v1291 = vld [vmem:[%s1287 + $0x18] sm:$0xff]
        %1293 = vset.pattern.permute.xlu0 0
        %1294 = vperm.xlu0 %1293, %v1278
        %v1295 = vpop.permute.xlu0 %1294
        %1298 = vset.pattern.permute.xlu0 0
        %1299 = vperm.xlu0 %1298, %v1279
        %v1300 = vpop.permute.xlu0 %1299
        %1303 = vset.pattern.permute.xlu0 0
        %1304 = vperm.xlu0 %1303, %v1280
        %v1305 = vpop.permute.xlu0 %1304
        %1308 = vset.pattern.permute.xlu0 0
        %1309 = vperm.xlu0 %1308, %v1281
        %v1310 = vpop.permute.xlu0 %1309
        %v1312 = vadd.f32 %v1273, %v1295
        %v1313 = vadd.f32 %v1274, %v1300
        %v1314 = vadd.f32 %v1275, %v1305
        %v1315 = vadd.f32 %v1276, %v1310
        %v1316 = vmax.f32 %v1312, 0.0
        %v1317 = vmax.f32 %v1313, 0.0
        %v1318 = vmax.f32 %v1314, 0.0
        %v1319 = vmax.f32 %v1315, 0.0
        %1320 = vset.pattern.permute.xlu0 7
        %1321 = vperm.xlu0 %1320, %v874
        %v1322 = vpop.permute.xlu0 %1321
        %1324 = vset.pattern.permute.xlu0 7
        %1325 = vperm.xlu0 %1324, %v875
        %v1326 = vpop.permute.xlu0 %1325
        %1328 = vset.pattern.permute.xlu0 7
        %1329 = vperm.xlu0 %1328, %v876
        %v1330 = vpop.permute.xlu0 %1329
        %1332 = vset.pattern.permute.xlu0 7
        %1333 = vperm.xlu0 %1332, %v877
        %v1334 = vpop.permute.xlu0 %1333
        %v1337 = vsel %vm1058, %v1283, 0
        %v1340 = vsel %vm1058, %v1284, 0
        %v1343 = vsel %vm1058, %v1285, 0
        %v1346 = vsel %vm1058, %v1286, 0
        %1348 = vmatprep.subr.mxu0 0.0
        %1349 = vmatpush1.msra.mxu0 0.0
        %1350 = vmatprep.subr.mxu0 0.0
        %1351 = vmatpush1.msra.mxu0 0.0
        %1352 = vmatprep.subr.mxu0 0.0
        %1353 = vmatpush1.msra.mxu0 0.0
        %1354 = vmatprep.subr.mxu0 0.0
        %1355 = vmatpush1.msra.mxu0 0.0
        %1356 = vmatprep.subr.mxu0 0.0
        %1357 = vmatpush1.msra.mxu0 0.0
        %1358 = vmatprep.subr.mxu0 0.0
        %1359 = vmatpush1.msra.mxu0 0.0
        %1360 = vmatprep.subr.mxu0 0.0
        %1361 = vmatpush1.msra.mxu0 0.0
        %1362 = vmatprep.subr.mxu0 0.0
        %1363 = vmatpush1.msra.mxu0 0.0
        %1364 = vmatprep.subr.mxu0 0.0
        %1365 = vmatpush1.msra.mxu0 0.0
        %1366 = vmatprep.subr.mxu0 0.0
        %1367 = vmatpush1.msra.mxu0 0.0
        %1368 = vmatprep.subr.mxu0 0.0
        %1369 = vmatpush1.msra.mxu0 0.0
        %1370 = vmatprep.subr.mxu0 0.0
        %1371 = vmatpush1.msra.mxu0 0.0
        %1372 = vmatprep.subr.mxu0 0.0
        %1373 = vmatpush1.msra.mxu0 %v1319
        %1374 = vmatprep.subr.mxu0 0.0
        %1375 = vmatpush1.msra.mxu0 %v1318
        %1376 = vmatprep.subr.mxu0 0.0
        %1377 = vmatpush1.msra.mxu0 %v1317
        %1378 = vmatprep.subr.mxu0 0.0
        %1379 = vmatpush1.msra.mxu0 %v1316
        %1380 = vmatprep.subr.mxu0 0.0
        %1381 = vmatpush2.msra.mxu0 0.0
        %1382 = vmatprep.subr.mxu0 0.0
        %1383 = vmatpush2.msra.mxu0 0.0
        %1384 = vmatprep.subr.mxu0 0.0
        %1385 = vmatpush2.msra.mxu0 0.0
        %1386 = vmatprep.subr.mxu0 0.0
        %1387 = vmatpush2.msra.mxu0 0.0
        %1388 = vmatprep.subr.mxu0 0.0
        %1389 = vmatpush2.msra.mxu0 0.0
        %1390 = vmatprep.subr.mxu0 0.0
        %1391 = vmatpush2.msra.mxu0 0.0
        %1392 = vmatprep.subr.mxu0 0.0
        %1393 = vmatpush2.msra.mxu0 0.0
        %1394 = vmatprep.subr.mxu0 0.0
        %1395 = vmatpush2.msra.mxu0 0.0
        %1396 = vmatprep.subr.mxu0 0.0
        %1397 = vmatpush2.msra.mxu0 0.0
        %1398 = vmatprep.subr.mxu0 0.0
        %1399 = vmatpush2.msra.mxu0 0.0
        %1400 = vmatprep.subr.mxu0 0.0
        %1401 = vmatpush2.msra.mxu0 0.0
        %1402 = vmatprep.subr.mxu0 0.0
        %1403 = vmatpush2.msra.mxu0 0.0
        %1404 = vmatprep.subr.mxu0 0.0
        %1405 = vmatpush2.msra.mxu0 0.0
        %1406 = vmatprep.subr.mxu0 0.0
        %1407 = vmatpush2.msra.mxu0 0.0
        %1408 = vmatprep.subr.mxu0 0.0
        %1409 = vmatpush2.msra.mxu0 0.0
        %1410 = vmatprep.subr.mxu0 0.0
        %1411 = vmatpush2.msra.mxu0 0.0
        %1412 = vmatprep.mubr.f32.mxu0 0.0
        %1413 = vmatmul.mubr.f32.gmra.mxu0 %v1337
        %v1414 = vpop.f32.mrf.mxu0
        %v1415 = vadd.f32 %v1322, %v1414
        %v1416 = vpop.f32.mrf.mxu0
        %1417 = vmatprep.mubr.f32.mxu0 0.0
        %1418 = vmatmul.mubr.f32.gmra.mxu0 %v1340
        %v1419 = vpop.f32.mrf.mxu0
        %v1420 = vadd.f32 %v1326, %v1419
        %v1421 = vpop.f32.mrf.mxu0
        %1422 = vmatprep.mubr.f32.mxu0 0.0
        %1423 = vmatmul.mubr.f32.gmra.mxu0 %v1343
        %v1424 = vpop.f32.mrf.mxu0
        %v1425 = vadd.f32 %v1330, %v1424
        %v1426 = vpop.f32.mrf.mxu0
        %1427 = vmatprep.mubr.f32.mxu0 0.0
        %1428 = vmatmul.mubr.f32.gmra.mxu0 %v1346
        %v1429 = vpop.f32.mrf.mxu0
        %v1430 = vadd.f32 %v1334, %v1429
        %v1431 = vpop.f32.mrf.mxu0
        %1432 = vdwg.mxu0
        %v1433 = vmax.f32 %v1415, 0.0
        %v1434 = vmax.f32 %v1420, 0.0
        %v1435 = vmax.f32 %v1425, 0.0
        %v1436 = vmax.f32 %v1430, 0.0
        %1437 = vset.pattern.permute.xlu0 8
        %1438 = vperm.xlu0 %1437, %v874
        %v1439 = vpop.permute.xlu0 %1438
        %1441 = vset.pattern.permute.xlu0 8
        %1442 = vperm.xlu0 %1441, %v875
        %v1443 = vpop.permute.xlu0 %1442
        %1445 = vset.pattern.permute.xlu0 8
        %1446 = vperm.xlu0 %1445, %v876
        %v1447 = vpop.permute.xlu0 %1446
        %1449 = vset.pattern.permute.xlu0 8
        %1450 = vperm.xlu0 %1449, %v877
        %v1451 = vpop.permute.xlu0 %1450
        %v1454 = vsel %vm1058, %v1288, 0
        %v1457 = vsel %vm1058, %v1289, 0
        %v1460 = vsel %vm1058, %v1290, 0
        %v1463 = vsel %vm1058, %v1291, 0
        %1465 = vmatprep.subr.mxu0 0.0
        %1466 = vmatpush1.msra.mxu0 0.0
        %1467 = vmatprep.subr.mxu0 0.0
        %1468 = vmatpush1.msra.mxu0 0.0
        %1469 = vmatprep.subr.mxu0 0.0
        %1470 = vmatpush1.msra.mxu0 0.0
        %1471 = vmatprep.subr.mxu0 0.0
        %1472 = vmatpush1.msra.mxu0 0.0
        %1473 = vmatprep.subr.mxu0 0.0
        %1474 = vmatpush1.msra.mxu0 0.0
        %1475 = vmatprep.subr.mxu0 0.0
        %1476 = vmatpush1.msra.mxu0 0.0
        %1477 = vmatprep.subr.mxu0 0.0
        %1478 = vmatpush1.msra.mxu0 0.0
        %1479 = vmatprep.subr.mxu0 0.0
        %1480 = vmatpush1.msra.mxu0 0.0
        %1481 = vmatprep.subr.mxu0 0.0
        %1482 = vmatpush1.msra.mxu0 0.0
        %1483 = vmatprep.subr.mxu0 0.0
        %1484 = vmatpush1.msra.mxu0 0.0
        %1485 = vmatprep.subr.mxu0 0.0
        %1486 = vmatpush1.msra.mxu0 0.0
        %1487 = vmatprep.subr.mxu0 0.0
        %1488 = vmatpush1.msra.mxu0 0.0
        %1489 = vmatprep.subr.mxu0 0.0
        %1490 = vmatpush1.msra.mxu0 %v1436
        %1491 = vmatprep.subr.mxu0 0.0
        %1492 = vmatpush1.msra.mxu0 %v1435
        %1493 = vmatprep.subr.mxu0 0.0
        %1494 = vmatpush1.msra.mxu0 %v1434
        %1495 = vmatprep.subr.mxu0 0.0
        %1496 = vmatpush1.msra.mxu0 %v1433
        %1497 = vmatprep.subr.mxu0 0.0
        %1498 = vmatpush2.msra.mxu0 0.0
        %1499 = vmatprep.subr.mxu0 0.0
        %1500 = vmatpush2.msra.mxu0 0.0
        %1501 = vmatprep.subr.mxu0 0.0
        %1502 = vmatpush2.msra.mxu0 0.0
        %1503 = vmatprep.subr.mxu0 0.0
        %1504 = vmatpush2.msra.mxu0 0.0
        %1505 = vmatprep.subr.mxu0 0.0
        %1506 = vmatpush2.msra.mxu0 0.0
        %1507 = vmatprep.subr.mxu0 0.0
        %1508 = vmatpush2.msra.mxu0 0.0
        %1509 = vmatprep.subr.mxu0 0.0
        %1510 = vmatpush2.msra.mxu0 0.0
        %1511 = vmatprep.subr.mxu0 0.0
        %1512 = vmatpush2.msra.mxu0 0.0
        %1513 = vmatprep.subr.mxu0 0.0
        %1514 = vmatpush2.msra.mxu0 0.0
        %1515 = vmatprep.subr.mxu0 0.0
        %1516 = vmatpush2.msra.mxu0 0.0
        %1517 = vmatprep.subr.mxu0 0.0
        %1518 = vmatpush2.msra.mxu0 0.0
        %1519 = vmatprep.subr.mxu0 0.0
        %1520 = vmatpush2.msra.mxu0 0.0
        %1521 = vmatprep.subr.mxu0 0.0
        %1522 = vmatpush2.msra.mxu0 0.0
        %1523 = vmatprep.subr.mxu0 0.0
        %1524 = vmatpush2.msra.mxu0 0.0
        %1525 = vmatprep.subr.mxu0 0.0
        %1526 = vmatpush2.msra.mxu0 0.0
        %1527 = vmatprep.subr.mxu0 0.0
        %1528 = vmatpush2.msra.mxu0 0.0
        %1529 = vmatprep.mubr.f32.mxu0 0.0
        %1530 = vmatmul.mubr.f32.gmra.mxu0 %v1454
        %v1531 = vpop.f32.mrf.mxu0
        %v1532 = vadd.f32 %v1439, %v1531
        %v1533 = vpop.f32.mrf.mxu0
        %1534 = vmatprep.mubr.f32.mxu0 0.0
        %1535 = vmatmul.mubr.f32.gmra.mxu0 %v1457
        %v1536 = vpop.f32.mrf.mxu0
        %v1537 = vadd.f32 %v1443, %v1536
        %v1538 = vpop.f32.mrf.mxu0
        %1539 = vmatprep.mubr.f32.mxu0 0.0
        %1540 = vmatmul.mubr.f32.gmra.mxu0 %v1460
        %v1541 = vpop.f32.mrf.mxu0
        %v1542 = vadd.f32 %v1447, %v1541
        %v1543 = vpop.f32.mrf.mxu0
        %1544 = vmatprep.mubr.f32.mxu0 0.0
        %1545 = vmatmul.mubr.f32.gmra.mxu0 %v1463
        %v1546 = vpop.f32.mrf.mxu0
        %v1547 = vadd.f32 %v1451, %v1546
        %v1548 = vpop.f32.mrf.mxu0
        %1549 = vdwg.mxu0
        %v1550 = vadd.f32 %v1312, %v1532
        %v1551 = vadd.f32 %v1313, %v1537
        %v1552 = vadd.f32 %v1314, %v1542
        %v1553 = vadd.f32 %v1315, %v1547
        %v1554 = vld [vmem:[%s4] sm:$0x1]
        %v1555 = vmax.f32 %v1550, 0.0
        %v1556 = vmax.f32 %v1551, 0.0
        %v1557 = vmax.f32 %v1552, 0.0
        %v1558 = vmax.f32 %v1553, 0.0
        %v1559 = vld [vmem:[#allocation3] sm:$0x1]
        %1561 = vset.pattern.permute.xlu0 0
        %1562 = vperm.xlu0 %1561, %v1559
        %v1563 = vpop.permute.xlu0 %1562
        %v1565 = vlaneseq
        %v1566 = vshrl.u32 %v1565, 7
        %v1567 = vsub.s32 0, %v1566
        %v1568 = vrot.slane %v1563, %v1567
        %v1570 = vsel %vm1058, %v1554, 0
        %1572 = vmatprep.subr.mxu0 0.0
        %1573 = vmatpush1.msra.mxu0 0.0
        %1574 = vmatprep.subr.mxu0 0.0
        %1575 = vmatpush1.msra.mxu0 0.0
        %1576 = vmatprep.subr.mxu0 0.0
        %1577 = vmatpush1.msra.mxu0 0.0
        %1578 = vmatprep.subr.mxu0 0.0
        %1579 = vmatpush1.msra.mxu0 0.0
        %1580 = vmatprep.subr.mxu0 0.0
        %1581 = vmatpush1.msra.mxu0 0.0
        %1582 = vmatprep.subr.mxu0 0.0
        %1583 = vmatpush1.msra.mxu0 0.0
        %1584 = vmatprep.subr.mxu0 0.0
        %1585 = vmatpush1.msra.mxu0 0.0
        %1586 = vmatprep.subr.mxu0 0.0
        %1587 = vmatpush1.msra.mxu0 0.0
        %1588 = vmatprep.subr.mxu0 0.0
        %1589 = vmatpush1.msra.mxu0 0.0
        %1590 = vmatprep.subr.mxu0 0.0
        %1591 = vmatpush1.msra.mxu0 0.0
        %1592 = vmatprep.subr.mxu0 0.0
        %1593 = vmatpush1.msra.mxu0 0.0
        %1594 = vmatprep.subr.mxu0 0.0
        %1595 = vmatpush1.msra.mxu0 0.0
        %1596 = vmatprep.subr.mxu0 0.0
        %1597 = vmatpush1.msra.mxu0 %v1558
        %1598 = vmatprep.subr.mxu0 0.0
        %1599 = vmatpush1.msra.mxu0 %v1557
        %1600 = vmatprep.subr.mxu0 0.0
        %1601 = vmatpush1.msra.mxu0 %v1556
        %1602 = vmatprep.subr.mxu0 0.0
        %1603 = vmatpush1.msra.mxu0 %v1555
        %1604 = vmatprep.subr.mxu0 0.0
        %1605 = vmatpush2.msra.mxu0 0.0
        %1606 = vmatprep.subr.mxu0 0.0
        %1607 = vmatpush2.msra.mxu0 0.0
        %1608 = vmatprep.subr.mxu0 0.0
        %1609 = vmatpush2.msra.mxu0 0.0
        %1610 = vmatprep.subr.mxu0 0.0
        %1611 = vmatpush2.msra.mxu0 0.0
        %1612 = vmatprep.subr.mxu0 0.0
        %1613 = vmatpush2.msra.mxu0 0.0
        %1614 = vmatprep.subr.mxu0 0.0
        %1615 = vmatpush2.msra.mxu0 0.0
        %1616 = vmatprep.subr.mxu0 0.0
        %1617 = vmatpush2.msra.mxu0 0.0
        %1618 = vmatprep.subr.mxu0 0.0
        %1619 = vmatpush2.msra.mxu0 0.0
        %1620 = vmatprep.subr.mxu0 0.0
        %1621 = vmatpush2.msra.mxu0 0.0
        %1622 = vmatprep.subr.mxu0 0.0
        %1623 = vmatpush2.msra.mxu0 0.0
        %1624 = vmatprep.subr.mxu0 0.0
        %1625 = vmatpush2.msra.mxu0 0.0
        %1626 = vmatprep.subr.mxu0 0.0
        %1627 = vmatpush2.msra.mxu0 0.0
        %1628 = vmatprep.subr.mxu0 0.0
        %1629 = vmatpush2.msra.mxu0 0.0
        %1630 = vmatprep.subr.mxu0 0.0
        %1631 = vmatpush2.msra.mxu0 0.0
        %1632 = vmatprep.subr.mxu0 0.0
        %1633 = vmatpush2.msra.mxu0 0.0
        %1634 = vmatprep.subr.mxu0 0.0
        %1635 = vmatpush2.msra.mxu0 0.0
        %1636 = vmatprep.mubr.f32.mxu0 0.0
        %1637 = vmatmul.mubr.f32.gmra.mxu0 %v1570
        %v1638 = vpop.f32.mrf.mxu0
        %v1639 = vadd.f32 %v1568, %v1638
        %v1640 = vpop.f32.mrf.mxu0
        %1641 = vdwg.mxu0
        %1642 = vst [vmem:[%s356] sm:$0x1] %v1639
        %p1643 = scmp.lt.s32.totalorder %s26, 1
        %s1644 = scalar_select %p1643, %s26, 1
        %p1645 = scmp.lt.s32.totalorder %s27, 1
        %s1646 = scalar_select %p1645, %s27, 1
        %s1647 = smul.addr %s1644, 2
        %s1648 = sadd.s32 %s1646, %s1647
        %s1649 = scalar_lea.vmem %s7, %s1648
        // Predicated region
        $region61: #{_lambda_.1} parent=47 // pred_check
          %p1650 = pneg %p213
        $region62: #{_lambda_.1} parent=47 // pred_check_branch
          %1652 = sbr.rel (%p1650) target = $region64
        $region63: #{_lambda_.1} parent=47 // pred_region
          _
        $region64: #{_lambda_.1} parent=47 // pred_fallthru
          _
      $region48: #{_lambda_.1} parent=5 // pred_fallthru
        _
      %p1653 = scmp.le.s32.totalorder 2, %s17
      // Predicated region
      $region65: #{_lambda_.1} parent=5 // pred_check
        %p1654 = pneg %p1653
      $region66: #{_lambda_.1} parent=5 // pred_check_branch
        %1656 = sbr.rel (%p1654) target = $region68
      $region67: #{_lambda_.1} parent=5 // pred_region
        %s1657 = ssub.s32 %s17, 2
        // Predicated region
        $region69: #{_lambda_.1} parent=67 // pred_check
          %p1658 = pneg %p219
        $region70: #{_lambda_.1} parent=67 // pred_check_branch
          %1660 = sbr.rel (%p1658) target = $region72
        $region71: #{_lambda_.1} parent=67 // pred_region
          %p1661 = scmp.lt.s32.totalorder %s28, 1
          %s1662 = scalar_select %p1661, %s28, 1
          %p1663 = scmp.lt.s32.totalorder %s29, 1
          %s1664 = scalar_select %p1663, %s29, 1
          %s1665 = smul.addr %s1662, 2
          %s1666 = sadd.s32 %s1664, %s1665
          %s1667 = scalar_lea.vmem %s7, %s1666
        $region72: #{_lambda_.1} parent=67 // pred_fallthru
          _
      $region68: #{_lambda_.1} parent=5 // pred_fallthru
        _
    $region6: #{_lambda_.1} parent=1 // loop_footer
      %s21 = sadd.s32 1, %s17
    $region7: #{_lambda_.1} parent=1 // loop_footer_branch
      %16 = sbr.rel target = $region3
    $region8: #{_lambda_.1} parent=1 // loop_exit
      _
    %1668 = vsyncpa [#allocation5], 1
    %s1669 = scalar_lea.sflag [#allocation5], 1
    %1670 = vsyncpa %s1669, 1
    %1671 = vsyncpa [#allocation7], 1

</llo_original>
